<compile_context>
chip_gen: v6e
topology: v6e:2x2x1
jax: 0.10.0
libtpu: 0.0.40
codegen_flags: <defaults>
</compile_context>

<pallas_src>
import jax
import jax.numpy as jnp
from jax import lax
from jax.experimental import pallas as pl
from jax.experimental.pallas import tpu as pltpu

NEG_SLOPE = 0.2  # PyG GATConv default negative_slope

_VMEM = pl.BlockSpec(memory_space=pltpu.MemorySpace.VMEM)


# ----------------------------------------------------------------------------
# In-kernel helper: one fused GATConv + skip-Linear layer on dense features.
#   w_cat = [W_gat | W_lin]   (Fin, 2H) bf16
#   b_comb = b_gat + b_lin    (1, H)   f32
#   a_dst_row / a_src_row     (1, H)   f32 attention vectors (lane-dense rows)
#   adjb_ref                  (N, N)   bf16 additive mask ref (0 / -1e30)
# ----------------------------------------------------------------------------
def _gat_dense_layer(x_bf16, adjb_ref, w_cat, a_dst_row, a_src_row, b_comb,
                     apply_relu):
    h_dim = w_cat.shape[1] // 2
    hcat = jnp.dot(x_bf16, w_cat, preferred_element_type=jnp.float32)  # (N, 2H)
    h = hcat[:, :h_dim]                                                # GAT proj
    lin = hcat[:, h_dim:]                                              # skip Lin

    # e[i, j] = adst . h_i + asrc . h_j
    #   sd: per-target score, lane reduction (VPU)          -> (N, 1)
    #   ss: per-source score, q@k^T-style contraction (MXU) -> (1, N)
    sd = jnp.sum(h * a_dst_row, axis=-1, keepdims=True)
    ss = lax.dot_general(a_src_row, h, (((1,), (1,)), ((), ())),
                         preferred_element_type=jnp.float32)
    e = sd + ss                                                        # (N, N)
    e = jnp.maximum(e, NEG_SLOPE * e)                                  # leaky_relu
    e = e + adjb_ref[...]                                              # bf16 mask, per-elem upcast

    # softmax over source nodes j with deferred normalization (every row has
    # >= 1 edge: self loops are guaranteed by the caller, as with PyG's
    # add_self_loops default).
    m = jnp.max(e, axis=-1, keepdims=True)
    p = jnp.exp(e - m)
    rowsum = jnp.sum(p, axis=-1, keepdims=True)                        # (N, 1)
    out = jnp.dot(p.astype(jnp.bfloat16), h.astype(jnp.bfloat16),
                  preferred_element_type=jnp.float32)                  # (N, H)
    out = out * pl.reciprocal(rowsum, approx=True) + lin + b_comb
    if apply_relu:
        out = jnp.maximum(out, 0.0)
    return out


# ----------------------------------------------------------------------------
# Single fused kernel: GAT layer 1 -> GAT layer 2 -> one-hot person gather ->
# (folded) fc3 on repeated project rows -> fc1 + relu + fc2 prediction head.
# ----------------------------------------------------------------------------
def _fused_forward_kernel(x_ref, adjb_ref,                   # (N,Fin) bf16, (N,N) bf16
                          w1_ref, a1d_ref, a1s_ref, b1_ref,
                          w2_ref, a2d_ref, a2s_ref, b2_ref,
                          sel_ref,                           # (PK, N) bf16 one-hot
                          prx_ref,                           # (PK, 768) bf16 (K-repeated)
                          w3h_ref, b3h_ref,                  # (768,C) bf16, (1,C) f32
                          hw1a_ref, hw2_ref, hb2_ref,        # (C,C) bf16, (1,C), (1,1)
                          o_ref):                            # (1, PK) f32
    # ---- two fused GATConv + Linear layers on the person graph ----
    h1 = _gat_dense_layer(x_ref[...], adjb_ref, w1_ref[...], a1d_ref[...],
                          a1s_ref[...], b1_ref[...], apply_relu=True)
    h2 = _gat_dense_layer(h1.astype(jnp.bfloat16), adjb_ref, w2_ref[...],
                          a2d_ref[...], a2s_ref[...], b2_ref[...],
                          apply_relu=False)

    # ---- gather queried person rows: one MXU matmul with a one-hot matrix ----
    pe = jnp.dot(sel_ref[...], h2.astype(jnp.bfloat16),
                 preferred_element_type=jnp.float32)                   # (PK, C)

    # ---- prediction head (fc3 folded into the project half of fc1) ----
    # fc1(cat([person, fc3(project)], -1)) == person @ W1a + prx @ (W3 @ W1b)
    #                                         + (b3 @ W1b + b1)
    h_all = (jnp.dot(pe.astype(jnp.bfloat16), hw1a_ref[...],
                     preferred_element_type=jnp.float32)
             + jnp.dot(prx_ref[...], w3h_ref[...],
                       preferred_element_type=jnp.float32)
             + b3h_ref[...])                                           # (PK, C)
    # TODO(synk): nn.Dropout is treated as inference-mode identity; training
    # mode would require pltpu.prng_seed/prng_random_bits masking.
    h_all = jnp.maximum(h_all, 0.0)
    # fc2 as one lane-oriented (1, PK) contraction + a single lane-dense store.
    row = lax.dot_general(hw2_ref[...], h_all, (((1,), (1,)), ((), ())),
                          preferred_element_type=jnp.float32)          # (1, PK)
    o_ref[...] = row + hb2_ref[...]


# ----------------------------------------------------------------------------
# Host glue
# ----------------------------------------------------------------------------
def _lookup_rows(n_id, nodeids):
    # torch: (nids == nodeid).nonzero() loop -> vectorized argmax here.
    # NOTE: an id missing from n_id silently maps to row 0 (torch would error).
    nodeids = jnp.asarray(nodeids)
    return jnp.argmax(n_id[None, :] == nodeids[:, None], axis=1)


def adjacency_bias(adj):
    """Additive attention mask: 0 where edge j->i exists, -1e30 otherwise."""
    return jnp.where(adj > 0, 0.0, -1e30).astype(jnp.bfloat16)


def graph_model_forward(packed, person_x, person_adj_bias, person_n_id,
                        person_ids, project_x, project_n_id, project_ids):
    person_idx = _lookup_rows(person_n_id, person_ids).astype(jnp.int32)  # (P*K,)
    proj_idx = _lookup_rows(project_n_id, project_ids)
    project_x_sel = project_x[proj_idx]                                   # (P, 768)

    n = person_x.shape[0]
    pk = int(person_idx.shape[0])
    p_cnt = int(project_x_sel.shape[0])
    assert pk % p_cnt == 0, "person count must be a multiple of project count"
    k_cnt = pk // p_cnt

    # One-hot row-selection matrix (single MXU gather in the kernel) and the
    # project rows repeated K times so they row-align with the person order.
    sel = jax.nn.one_hot(person_idx, n, dtype=jnp.bfloat16)               # (PK, N)
    prx_rep = jnp.repeat(project_x_sel, k_cnt, axis=0).astype(jnp.bfloat16)  # (PK, 768)

    row = pl.pallas_call(
        _fused_forward_kernel,
        out_shape=jax.ShapeDtypeStruct((1, pk), jnp.float32),
        in_specs=[_VMEM] * 17,
        out_specs=_VMEM,
        compiler_params=pltpu.CompilerParams(vmem_limit_bytes=32 * 1024 * 1024),
    )(person_x.astype(jnp.bfloat16), person_adj_bias,
      packed["w1_cat"], packed["a1_dst"], packed["a1_src"], packed["b1"],
      packed["w2_cat"], packed["a2_dst"], packed["a2_src"], packed["b2"],
      sel, prx_rep, packed["w3h"], packed["b3h"],
      packed["hw1a"], packed["hw2"], packed["hb2"])
    return row.reshape(p_cnt, k_cnt)


# ----------------------------------------------------------------------------
# Parameters (torch-like raw params + fused packing for the kernel)
# ----------------------------------------------------------------------------
def init_params(key, fin_person, hidden, out):
    ks = list(jax.random.split(key, 20))
    s = 0.1

    def rnd(k, shape):
        return jax.random.normal(k, shape, jnp.float32) * s

    # TODO(synk): to_hetero expands the GAT per edge type and sums; the hetero
    # graph metadata is runtime data, so this uses a single homogeneous
    # person->person edge type (faithful GATConv + Linear math per layer).
    return {
        "gat1": dict(w=rnd(ks[0], (fin_person, hidden)),
                     asrc=rnd(ks[1], (hidden, 1)),
                     adst=rnd(ks[2], (hidden, 1)),
                     bg=rnd(ks[3], (1, hidden)),
                     wl=rnd(ks[4], (fin_person, hidden)),
                     bl=rnd(ks[5], (1, hidden))),
        "gat2": dict(w=rnd(ks[6], (hidden, out)),
                     asrc=rnd(ks[7], (out, 1)),
                     adst=rnd(ks[8], (out, 1)),
                     bg=rnd(ks[9], (1, out)),
                     wl=rnd(ks[10], (hidden, out)),
                     bl=rnd(ks[11], (1, out))),
        "fc3": dict(w=rnd(ks[12], (768, out)), b=rnd(ks[13], (1, out))),
        "head": dict(w1a=rnd(ks[14], (out, out)),    # fc1 weight, person half
                     w1b=rnd(ks[15], (out, out)),    # fc1 weight, project half
                     b1=rnd(ks[16], (1, out)),
                     w2=rnd(ks[17], (out, 1)),       # fc2
                     b2=rnd(ks[18], (1, 1))),
    }


def pack_params(p):
    """Fuse weights for the kernel: merged GAT/skip matmuls (bf16), row
    attention vectors, combined biases, fc3 folded into the head's project
    half of fc1, fc2 weight as a lane-dense row."""
    g1, g2, fc3, hd = p["gat1"], p["gat2"], p["fc3"], p["head"]
    bf16 = jnp.bfloat16
    return {
        "w1_cat": jnp.concatenate([g1["w"], g1["wl"]], axis=1).astype(bf16),
        "a1_dst": g1["adst"].T, "a1_src": g1["asrc"].T,           # (1, H)
        "b1": g1["bg"] + g1["bl"],                                # (1, H)
        "w2_cat": jnp.concatenate([g2["w"], g2["wl"]], axis=1).astype(bf16),
        "a2_dst": g2["adst"].T, "a2_src": g2["asrc"].T,           # (1, C)
        "b2": g2["bg"] + g2["bl"],                                # (1, C)
        # fc3 folded into fc1's project half (no nonlinearity between them):
        "w3h": jnp.dot(fc3["w"], hd["w1b"]).astype(bf16),         # (768, C)
        "b3h": jnp.dot(fc3["b"], hd["w1b"]) + hd["b1"],           # (1, C)
        "hw1a": hd["w1a"].astype(bf16),                           # (C, C)
        "hw2": hd["w2"].T, "hb2": hd["b2"],                       # (1,C),(1,1)
    }


if __name__ == "__main__":
    key = jax.random.PRNGKey(0)
    hidden_channels, out_channels = 32, 32
    fin_person = 64
    n_person, n_project = 16, 8
    n_proj_query, persons_per_proj = 2, 4

    kp, kq, ka, kparam = jax.random.split(key, 4)
    raw_params = init_params(kparam, fin_person, hidden_channels, out_channels)
    packed = pack_params(raw_params)

    person_x = jax.random.normal(kp, (n_person, fin_person), jnp.float32)
    project_x = jax.random.normal(kq, (n_project, 768), jnp.float32)

    # dense adjacency with GATConv-default self loops, turned into an
    # additive bf16 attention mask on host.
    adj = (jax.random.uniform(ka, (n_person, n_person)) < 0.3).astype(jnp.float32)
    person_adj = jnp.maximum(adj, jnp.eye(n_person, dtype=jnp.float32))
    person_adj_bias = adjacency_bias(person_adj)

    # subgraph node-id tables and the queried global node ids
    person_n_id = jnp.arange(n_person, dtype=jnp.int32) * 3 + 1
    project_n_id = jnp.arange(n_project, dtype=jnp.int32) * 5 + 2
    person_ids = [1, 4, 7, 10, 13, 16, 19, 22]       # P*K = 8 queried persons
    project_ids = [2, 12]                             # P = 2 queried projects

    logits = graph_model_forward(packed, person_x, person_adj_bias,
                                 person_n_id, person_ids, project_x,
                                 project_n_id, project_ids)
    jax.block_until_ready(logits)
    assert logits.shape == (n_proj_query, persons_per_proj), logits.shape
    print("KERNEL_OK")
</pallas_src>

<mosaic_0001>
module attributes {stable_mosaic.version = 11 : i64} {
  func.func @_fused_forward_kernel(%arg0: memref<16x64xbf16, #tpu.memory_space<vmem>>, %arg1: memref<16x16xbf16, #tpu.memory_space<vmem>>, %arg2: memref<64x64xbf16, #tpu.memory_space<vmem>>, %arg3: memref<1x32xf32, #tpu.memory_space<vmem>>, %arg4: memref<1x32xf32, #tpu.memory_space<vmem>>, %arg5: memref<1x32xf32, #tpu.memory_space<vmem>>, %arg6: memref<32x64xbf16, #tpu.memory_space<vmem>>, %arg7: memref<1x32xf32, #tpu.memory_space<vmem>>, %arg8: memref<1x32xf32, #tpu.memory_space<vmem>>, %arg9: memref<1x32xf32, #tpu.memory_space<vmem>>, %arg10: memref<8x16xbf16, #tpu.memory_space<vmem>>, %arg11: memref<8x768xbf16, #tpu.memory_space<vmem>>, %arg12: memref<768x32xbf16, #tpu.memory_space<vmem>>, %arg13: memref<1x32xf32, #tpu.memory_space<vmem>>, %arg14: memref<32x32xbf16, #tpu.memory_space<vmem>>, %arg15: memref<1x32xf32, #tpu.memory_space<vmem>>, %arg16: memref<1x1xf32, #tpu.memory_space<vmem>>, %arg17: memref<1x8xf32, #tpu.memory_space<vmem>>) attributes {dimension_semantics = [], scalar_prefetch = 0 : i64, scratch_operands = 0 : i64, tpu.core_type = #tpu.core_type<tc>} {
    %c0 = arith.constant 0 : index
    %c0_0 = arith.constant 0 : index
    %0 = vector.load %arg0[%c0, %c0_0] : memref<16x64xbf16, #tpu.memory_space<vmem>>, vector<16x64xbf16>
    %c0_1 = arith.constant 0 : index
    %c0_2 = arith.constant 0 : index
    %1 = vector.load %arg2[%c0_1, %c0_2] : memref<64x64xbf16, #tpu.memory_space<vmem>>, vector<64x64xbf16>
    %c0_3 = arith.constant 0 : index
    %c0_4 = arith.constant 0 : index
    %2 = vector.load %arg3[%c0_3, %c0_4] : memref<1x32xf32, #tpu.memory_space<vmem>>, vector<1x32xf32>
    %c0_5 = arith.constant 0 : index
    %c0_6 = arith.constant 0 : index
    %3 = vector.load %arg4[%c0_5, %c0_6] : memref<1x32xf32, #tpu.memory_space<vmem>>, vector<1x32xf32>
    %c0_7 = arith.constant 0 : index
    %c0_8 = arith.constant 0 : index
    %4 = vector.load %arg5[%c0_7, %c0_8] : memref<1x32xf32, #tpu.memory_space<vmem>>, vector<1x32xf32>
    %cst = arith.constant dense<0.000000e+00> : vector<16x64xf32>
    %5 = tpu.matmul %0, %1, %cst {dimension_numbers = #tpu.dot_dimension_numbers<[1], [0], [0], [1], [0, 0, 1, 1], [], []>} : vector<16x64xbf16>, vector<64x64xbf16>, vector<16x64xf32> -> vector<16x64xf32>
    %6 = vector.extract_strided_slice %5 {offsets = [0, 0], sizes = [16, 32], strides = [1, 1]} : vector<16x64xf32> to vector<16x32xf32>
    %7 = vector.extract_strided_slice %5 {offsets = [0, 32], sizes = [16, 32], strides = [1, 1]} : vector<16x64xf32> to vector<16x32xf32>
    %8 = vector.broadcast %2 : vector<1x32xf32> to vector<16x32xf32>
    %9 = arith.mulf %6, %8 : vector<16x32xf32>
    %cst_9 = arith.constant dense<0.000000e+00> : vector<16xf32>
    %10 = vector.multi_reduction <add>, %9, %cst_9 [1] : vector<16x32xf32> to vector<16xf32>
    %11 = vector.shape_cast %10 : vector<16xf32> to vector<16x1xf32>
    %cst_10 = arith.constant dense<0.000000e+00> : vector<1x16xf32>
    %12 = tpu.matmul %3, %6, %cst_10 {dimension_numbers = #tpu.dot_dimension_numbers<[1], [1], [0], [0], [0, 0, 1, 0], [], []>} : vector<1x32xf32>, vector<16x32xf32>, vector<1x16xf32> -> vector<1x16xf32>
    %13 = vector.broadcast %11 : vector<16x1xf32> to vector<16x16xf32>
    %14 = vector.broadcast %12 : vector<1x16xf32> to vector<16x16xf32>
    %15 = arith.addf %13, %14 : vector<16x16xf32>
    %cst_11 = arith.constant 2.000000e-01 : f32
    %16 = vector.broadcast %cst_11 : f32 to vector<16x16xf32>
    %17 = arith.mulf %16, %15 : vector<16x16xf32>
    %18 = arith.maximumf %15, %17 : vector<16x16xf32>
    %c0_12 = arith.constant 0 : index
    %c0_13 = arith.constant 0 : index
    %19 = vector.load %arg1[%c0_12, %c0_13] : memref<16x16xbf16, #tpu.memory_space<vmem>>, vector<16x16xbf16>
    %20 = arith.extf %19 : vector<16x16xbf16> to vector<16x16xf32>
    %21 = arith.addf %18, %20 : vector<16x16xf32>
    %cst_14 = arith.constant dense<0xFF800000> : vector<16xf32>
    %22 = vector.multi_reduction <maximumf>, %21, %cst_14 [1] : vector<16x16xf32> to vector<16xf32>
    %23 = vector.shape_cast %22 : vector<16xf32> to vector<16x1xf32>
    %24 = vector.broadcast %23 : vector<16x1xf32> to vector<16x16xf32>
    %25 = arith.subf %21, %24 : vector<16x16xf32>
    %26 = math.exp %25 : vector<16x16xf32>
    %cst_15 = arith.constant dense<0.000000e+00> : vector<16xf32>
    %27 = vector.multi_reduction <add>, %26, %cst_15 [1] : vector<16x16xf32> to vector<16xf32>
    %28 = vector.shape_cast %27 : vector<16xf32> to vector<16x1xf32>
    %29 = arith.truncf %26 : vector<16x16xf32> to vector<16x16xbf16>
    %30 = arith.truncf %6 : vector<16x32xf32> to vector<16x32xbf16>
    %cst_16 = arith.constant dense<0.000000e+00> : vector<16x32xf32>
    %31 = tpu.matmul %29, %30, %cst_16 {dimension_numbers = #tpu.dot_dimension_numbers<[1], [0], [0], [1], [0, 0, 1, 1], [], []>} : vector<16x16xbf16>, vector<16x32xbf16>, vector<16x32xf32> -> vector<16x32xf32>
    %32 = tpu.reciprocal %28 {approx = true} : vector<16x1xf32> -> vector<16x1xf32>
    %33 = vector.broadcast %32 : vector<16x1xf32> to vector<16x32xf32>
    %34 = arith.mulf %31, %33 : vector<16x32xf32>
    %35 = arith.addf %34, %7 : vector<16x32xf32>
    %36 = vector.broadcast %4 : vector<1x32xf32> to vector<16x32xf32>
    %37 = arith.addf %35, %36 : vector<16x32xf32>
    %cst_17 = arith.constant 0.000000e+00 : f32
    %38 = vector.broadcast %cst_17 : f32 to vector<16x32xf32>
    %39 = arith.maximumf %37, %38 : vector<16x32xf32>
    %40 = arith.truncf %39 : vector<16x32xf32> to vector<16x32xbf16>
    %c0_18 = arith.constant 0 : index
    %c0_19 = arith.constant 0 : index
    %41 = vector.load %arg6[%c0_18, %c0_19] : memref<32x64xbf16, #tpu.memory_space<vmem>>, vector<32x64xbf16>
    %c0_20 = arith.constant 0 : index
    %c0_21 = arith.constant 0 : index
    %42 = vector.load %arg7[%c0_20, %c0_21] : memref<1x32xf32, #tpu.memory_space<vmem>>, vector<1x32xf32>
    %c0_22 = arith.constant 0 : index
    %c0_23 = arith.constant 0 : index
    %43 = vector.load %arg8[%c0_22, %c0_23] : memref<1x32xf32, #tpu.memory_space<vmem>>, vector<1x32xf32>
    %c0_24 = arith.constant 0 : index
    %c0_25 = arith.constant 0 : index
    %44 = vector.load %arg9[%c0_24, %c0_25] : memref<1x32xf32, #tpu.memory_space<vmem>>, vector<1x32xf32>
    %cst_26 = arith.constant dense<0.000000e+00> : vector<16x64xf32>
    %45 = tpu.matmul %40, %41, %cst_26 {dimension_numbers = #tpu.dot_dimension_numbers<[1], [0], [0], [1], [0, 0, 1, 1], [], []>} : vector<16x32xbf16>, vector<32x64xbf16>, vector<16x64xf32> -> vector<16x64xf32>
    %46 = vector.extract_strided_slice %45 {offsets = [0, 0], sizes = [16, 32], strides = [1, 1]} : vector<16x64xf32> to vector<16x32xf32>
    %47 = vector.extract_strided_slice %45 {offsets = [0, 32], sizes = [16, 32], strides = [1, 1]} : vector<16x64xf32> to vector<16x32xf32>
    %48 = vector.broadcast %42 : vector<1x32xf32> to vector<16x32xf32>
    %49 = arith.mulf %46, %48 : vector<16x32xf32>
    %cst_27 = arith.constant dense<0.000000e+00> : vector<16xf32>
    %50 = vector.multi_reduction <add>, %49, %cst_27 [1] : vector<16x32xf32> to vector<16xf32>
    %51 = vector.shape_cast %50 : vector<16xf32> to vector<16x1xf32>
    %cst_28 = arith.constant dense<0.000000e+00> : vector<1x16xf32>
    %52 = tpu.matmul %43, %46, %cst_28 {dimension_numbers = #tpu.dot_dimension_numbers<[1], [1], [0], [0], [0, 0, 1, 0], [], []>} : vector<1x32xf32>, vector<16x32xf32>, vector<1x16xf32> -> vector<1x16xf32>
    %53 = vector.broadcast %51 : vector<16x1xf32> to vector<16x16xf32>
    %54 = vector.broadcast %52 : vector<1x16xf32> to vector<16x16xf32>
    %55 = arith.addf %53, %54 : vector<16x16xf32>
    %cst_29 = arith.constant 2.000000e-01 : f32
    %56 = vector.broadcast %cst_29 : f32 to vector<16x16xf32>
    %57 = arith.mulf %56, %55 : vector<16x16xf32>
    %58 = arith.maximumf %55, %57 : vector<16x16xf32>
    %c0_30 = arith.constant 0 : index
    %c0_31 = arith.constant 0 : index
    %59 = vector.load %arg1[%c0_30, %c0_31] : memref<16x16xbf16, #tpu.memory_space<vmem>>, vector<16x16xbf16>
    %60 = arith.extf %59 : vector<16x16xbf16> to vector<16x16xf32>
    %61 = arith.addf %58, %60 : vector<16x16xf32>
    %cst_32 = arith.constant dense<0xFF800000> : vector<16xf32>
    %62 = vector.multi_reduction <maximumf>, %61, %cst_32 [1] : vector<16x16xf32> to vector<16xf32>
    %63 = vector.shape_cast %62 : vector<16xf32> to vector<16x1xf32>
    %64 = vector.broadcast %63 : vector<16x1xf32> to vector<16x16xf32>
    %65 = arith.subf %61, %64 : vector<16x16xf32>
    %66 = math.exp %65 : vector<16x16xf32>
    %cst_33 = arith.constant dense<0.000000e+00> : vector<16xf32>
    %67 = vector.multi_reduction <add>, %66, %cst_33 [1] : vector<16x16xf32> to vector<16xf32>
    %68 = vector.shape_cast %67 : vector<16xf32> to vector<16x1xf32>
    %69 = arith.truncf %66 : vector<16x16xf32> to vector<16x16xbf16>
    %70 = arith.truncf %46 : vector<16x32xf32> to vector<16x32xbf16>
    %cst_34 = arith.constant dense<0.000000e+00> : vector<16x32xf32>
    %71 = tpu.matmul %69, %70, %cst_34 {dimension_numbers = #tpu.dot_dimension_numbers<[1], [0], [0], [1], [0, 0, 1, 1], [], []>} : vector<16x16xbf16>, vector<16x32xbf16>, vector<16x32xf32> -> vector<16x32xf32>
    %72 = tpu.reciprocal %68 {approx = true} : vector<16x1xf32> -> vector<16x1xf32>
    %73 = vector.broadcast %72 : vector<16x1xf32> to vector<16x32xf32>
    %74 = arith.mulf %71, %73 : vector<16x32xf32>
    %75 = arith.addf %74, %47 : vector<16x32xf32>
    %76 = vector.broadcast %44 : vector<1x32xf32> to vector<16x32xf32>
    %77 = arith.addf %75, %76 : vector<16x32xf32>
    %c0_35 = arith.constant 0 : index
    %c0_36 = arith.constant 0 : index
    %78 = vector.load %arg10[%c0_35, %c0_36] : memref<8x16xbf16, #tpu.memory_space<vmem>>, vector<8x16xbf16>
    %79 = arith.truncf %77 : vector<16x32xf32> to vector<16x32xbf16>
    %cst_37 = arith.constant dense<0.000000e+00> : vector<8x32xf32>
    %80 = tpu.matmul %78, %79, %cst_37 {dimension_numbers = #tpu.dot_dimension_numbers<[1], [0], [0], [1], [0, 0, 1, 1], [], []>} : vector<8x16xbf16>, vector<16x32xbf16>, vector<8x32xf32> -> vector<8x32xf32>
    %81 = arith.truncf %80 : vector<8x32xf32> to vector<8x32xbf16>
    %c0_38 = arith.constant 0 : index
    %c0_39 = arith.constant 0 : index
    %82 = vector.load %arg14[%c0_38, %c0_39] : memref<32x32xbf16, #tpu.memory_space<vmem>>, vector<32x32xbf16>
    %cst_40 = arith.constant dense<0.000000e+00> : vector<8x32xf32>
    %83 = tpu.matmul %81, %82, %cst_40 {dimension_numbers = #tpu.dot_dimension_numbers<[1], [0], [0], [1], [0, 0, 1, 1], [], []>} : vector<8x32xbf16>, vector<32x32xbf16>, vector<8x32xf32> -> vector<8x32xf32>
    %c0_41 = arith.constant 0 : index
    %c0_42 = arith.constant 0 : index
    %84 = vector.load %arg11[%c0_41, %c0_42] : memref<8x768xbf16, #tpu.memory_space<vmem>>, vector<8x768xbf16>
    %c0_43 = arith.constant 0 : index
    %c0_44 = arith.constant 0 : index
    %85 = vector.load %arg12[%c0_43, %c0_44] : memref<768x32xbf16, #tpu.memory_space<vmem>>, vector<768x32xbf16>
    %cst_45 = arith.constant dense<0.000000e+00> : vector<8x32xf32>
    %86 = tpu.matmul %84, %85, %cst_45 {dimension_numbers = #tpu.dot_dimension_numbers<[1], [0], [0], [1], [0, 0, 1, 1], [], []>} : vector<8x768xbf16>, vector<768x32xbf16>, vector<8x32xf32> -> vector<8x32xf32>
    %87 = arith.addf %83, %86 : vector<8x32xf32>
    %c0_46 = arith.constant 0 : index
    %c0_47 = arith.constant 0 : index
    %88 = vector.load %arg13[%c0_46, %c0_47] : memref<1x32xf32, #tpu.memory_space<vmem>>, vector<1x32xf32>
    %89 = vector.broadcast %88 : vector<1x32xf32> to vector<8x32xf32>
    %90 = arith.addf %87, %89 : vector<8x32xf32>
    %cst_48 = arith.constant 0.000000e+00 : f32
    %91 = vector.broadcast %cst_48 : f32 to vector<8x32xf32>
    %92 = arith.maximumf %90, %91 : vector<8x32xf32>
    %c0_49 = arith.constant 0 : index
    %c0_50 = arith.constant 0 : index
    %93 = vector.load %arg15[%c0_49, %c0_50] : memref<1x32xf32, #tpu.memory_space<vmem>>, vector<1x32xf32>
    %cst_51 = arith.constant dense<0.000000e+00> : vector<1x8xf32>
    %94 = tpu.matmul %93, %92, %cst_51 {dimension_numbers = #tpu.dot_dimension_numbers<[1], [1], [0], [0], [0, 0, 1, 0], [], []>} : vector<1x32xf32>, vector<8x32xf32>, vector<1x8xf32> -> vector<1x8xf32>
    %c0_52 = arith.constant 0 : index
    %c0_53 = arith.constant 0 : index
    %95 = vector.load %arg16[%c0_52, %c0_53] : memref<1x1xf32, #tpu.memory_space<vmem>>, vector<1x1xf32>
    %96 = vector.broadcast %95 : vector<1x1xf32> to vector<1x8xf32>
    %97 = arith.addf %94, %96 : vector<1x8xf32>
    %c0_54 = arith.constant 0 : index
    %c0_55 = arith.constant 0 : index
    %98 = vector.load %arg17[%c0_54, %c0_55] : memref<1x8xf32, #tpu.memory_space<vmem>>, vector<1x8xf32>
    tpu.vector_store %arg17[%c0_54, %c0_55], %97 {strides = array<i32>} : memref<1x8xf32, #tpu.memory_space<vmem>>, vector<1x8xf32>,
    return
  }
}

</mosaic_0001>

<llo_original>
// kernel: tpu_custom_call.1
$region0: #{tpu_custom_call.1}
  #allocation0 [shape = 'u32[]', space=smem, size = 0x4, offset = 0x4, fixed_abs, tag = 'smem constant byte address 0x4 - core index']
  #allocation1 [shape = 'u32[144,128]{1,0:T(1,128)}', space=vmem, size = 0x12000, scoped, tag = 'internal scratch']
  #allocation2 [shape = 'f32[1,1]{1,0:T(1,128)S(1)}', space=vmem, size = 0x200, scoped, tag = 'scoped memory for tpu_custom_call.1']
  %s0 = inlined_call_operand.vmem [shape: bf16[16,64], index: 0, kind: input, shape index: {}]
  %s1 = inlined_call_operand.vmem [shape: bf16[16,16], index: 1, kind: input, shape index: {}]
  %s2 = inlined_call_operand.vmem [shape: bf16[64,64], index: 2, kind: input, shape index: {}]
  %s3 = inlined_call_operand.vmem [shape: f32[1,32], index: 3, kind: input, shape index: {}]
  %s4 = inlined_call_operand.vmem [shape: f32[1,32], index: 4, kind: input, shape index: {}]
  %s5 = inlined_call_operand.vmem [shape: f32[1,32], index: 5, kind: input, shape index: {}]
  %s6 = inlined_call_operand.vmem [shape: bf16[32,64], index: 6, kind: input, shape index: {}]
  %s7 = inlined_call_operand.vmem [shape: f32[1,32], index: 7, kind: input, shape index: {}]
  %s8 = inlined_call_operand.vmem [shape: f32[1,32], index: 8, kind: input, shape index: {}]
  %s9 = inlined_call_operand.vmem [shape: f32[1,32], index: 9, kind: input, shape index: {}]
  %s10 = inlined_call_operand.vmem [shape: bf16[8,16], index: 10, kind: input, shape index: {}]
  %s11 = inlined_call_operand.vmem [shape: bf16[8,768], index: 11, kind: input, shape index: {}]
  %s12 = inlined_call_operand.vmem [shape: bf16[768,32], index: 12, kind: input, shape index: {}]
  %s13 = inlined_call_operand.vmem [shape: f32[1,32], index: 13, kind: input, shape index: {}]
  %s14 = inlined_call_operand.vmem [shape: bf16[32,32], index: 14, kind: input, shape index: {}]
  %s15 = inlined_call_operand.vmem [shape: f32[1,32], index: 15, kind: input, shape index: {}]
  %s16 = inlined_call_operand.<no memory space> [shape: f32[1,1], index: 16, kind: input, shape index: {}]
  %s17 = inlined_call_operand.hbm [shape: f32[1,8], index: 17, kind: output, shape index: {}]
  %s18 = sld [smem:[#allocation0]]
  $region78: #{tpu_custom_call.1} parent=0
    _
  %s20 = ssub.s32 1, %s18
  %s21 = scalar_select 0, %s20, %s18
  %v22 = vstv %s16
  %23 = vst [vmem:[#allocation2] sm:$0x1] %v22
  $region1: #{tpu_custom_call.1} parent=0
    #allocation3 [shape = 'u8[512]{0}', space=vmem, size = 0x400, scoped, tag = 'output window, operand 0, single buffered']
    #allocation4 [shape = 's32[1]{0}', space=sflag, size = 0x4, scoped, tag = 'scoped memory for tpu_custom_call.1']
    %24 = vsyncpa [#allocation4], 0
    // Predicated region
    $region2: #{tpu_custom_call.1} parent=1 // pred_check
      _
    $region3: #{tpu_custom_call.1} parent=1 // pred_check_branch
      %26 = sbr.rel (0) target = $region5
    $region4: #{tpu_custom_call.1} parent=1 // pred_region
      _
    $region5: #{tpu_custom_call.1} parent=1 // pred_fallthru
      _
    // Predicated region
    $region6: #{tpu_custom_call.1} parent=1 // pred_check
      _
    $region7: #{tpu_custom_call.1} parent=1 // pred_check_branch
      %28 = sbr.rel (0) target = $region9
    $region8: #{tpu_custom_call.1} parent=1 // pred_region
      _
    $region9: #{tpu_custom_call.1} parent=1 // pred_fallthru
      _
    // Predicated region
    $region10: #{tpu_custom_call.1} parent=1 // pred_check
      _
    $region11: #{tpu_custom_call.1} parent=1 // pred_check_branch
      %30 = sbr.rel (0) target = $region13
    $region12: #{tpu_custom_call.1} parent=1 // pred_region
      _
    $region13: #{tpu_custom_call.1} parent=1 // pred_fallthru
      _
    // Predicated region
    $region14: #{tpu_custom_call.1} parent=1 // pred_check
      _
    $region15: #{tpu_custom_call.1} parent=1 // pred_check_branch
      %32 = sbr.rel (0) target = $region17
    $region16: #{tpu_custom_call.1} parent=1 // pred_region
      _
    $region17: #{tpu_custom_call.1} parent=1 // pred_fallthru
      _
    // Predicated region
    $region18: #{tpu_custom_call.1} parent=1 // pred_check
      _
    $region19: #{tpu_custom_call.1} parent=1 // pred_check_branch
      %34 = sbr.rel (0) target = $region21
    $region20: #{tpu_custom_call.1} parent=1 // pred_region
      _
    $region21: #{tpu_custom_call.1} parent=1 // pred_fallthru
      _
    // Predicated region
    $region22: #{tpu_custom_call.1} parent=1 // pred_check
      _
    $region23: #{tpu_custom_call.1} parent=1 // pred_check_branch
      %36 = sbr.rel (0) target = $region25
    $region24: #{tpu_custom_call.1} parent=1 // pred_region
      _
    $region25: #{tpu_custom_call.1} parent=1 // pred_fallthru
      _
    // Predicated region
    $region26: #{tpu_custom_call.1} parent=1 // pred_check
      _
    $region27: #{tpu_custom_call.1} parent=1 // pred_check_branch
      %38 = sbr.rel (0) target = $region29
    $region28: #{tpu_custom_call.1} parent=1 // pred_region
      _
    $region29: #{tpu_custom_call.1} parent=1 // pred_fallthru
      _
    // Predicated region
    $region30: #{tpu_custom_call.1} parent=1 // pred_check
      _
    $region31: #{tpu_custom_call.1} parent=1 // pred_check_branch
      %40 = sbr.rel (0) target = $region33
    $region32: #{tpu_custom_call.1} parent=1 // pred_region
      _
    $region33: #{tpu_custom_call.1} parent=1 // pred_fallthru
      _
    // Predicated region
    $region34: #{tpu_custom_call.1} parent=1 // pred_check
      _
    $region35: #{tpu_custom_call.1} parent=1 // pred_check_branch
      %42 = sbr.rel (0) target = $region37
    $region36: #{tpu_custom_call.1} parent=1 // pred_region
      _
    $region37: #{tpu_custom_call.1} parent=1 // pred_fallthru
      _
    // Predicated region
    $region38: #{tpu_custom_call.1} parent=1 // pred_check
      _
    $region39: #{tpu_custom_call.1} parent=1 // pred_check_branch
      %44 = sbr.rel (0) target = $region41
    $region40: #{tpu_custom_call.1} parent=1 // pred_region
      _
    $region41: #{tpu_custom_call.1} parent=1 // pred_fallthru
      _
    // Predicated region
    $region42: #{tpu_custom_call.1} parent=1 // pred_check
      _
    $region43: #{tpu_custom_call.1} parent=1 // pred_check_branch
      %46 = sbr.rel (0) target = $region45
    $region44: #{tpu_custom_call.1} parent=1 // pred_region
      _
    $region45: #{tpu_custom_call.1} parent=1 // pred_fallthru
      _
    // Predicated region
    $region46: #{tpu_custom_call.1} parent=1 // pred_check
      _
    $region47: #{tpu_custom_call.1} parent=1 // pred_check_branch
      %48 = sbr.rel (0) target = $region49
    $region48: #{tpu_custom_call.1} parent=1 // pred_region
      _
    $region49: #{tpu_custom_call.1} parent=1 // pred_fallthru
      _
    // Predicated region
    $region50: #{tpu_custom_call.1} parent=1 // pred_check
      _
    $region51: #{tpu_custom_call.1} parent=1 // pred_check_branch
      %50 = sbr.rel (0) target = $region53
    $region52: #{tpu_custom_call.1} parent=1 // pred_region
      _
    $region53: #{tpu_custom_call.1} parent=1 // pred_fallthru
      _
    // Predicated region
    $region54: #{tpu_custom_call.1} parent=1 // pred_check
      _
    $region55: #{tpu_custom_call.1} parent=1 // pred_check_branch
      %52 = sbr.rel (0) target = $region57
    $region56: #{tpu_custom_call.1} parent=1 // pred_region
      _
    $region57: #{tpu_custom_call.1} parent=1 // pred_fallthru
      _
    // Predicated region
    $region58: #{tpu_custom_call.1} parent=1 // pred_check
      _
    $region59: #{tpu_custom_call.1} parent=1 // pred_check_branch
      %54 = sbr.rel (0) target = $region61
    $region60: #{tpu_custom_call.1} parent=1 // pred_region
      _
    $region61: #{tpu_custom_call.1} parent=1 // pred_fallthru
      _
    // Predicated region
    $region62: #{tpu_custom_call.1} parent=1 // pred_check
      _
    $region63: #{tpu_custom_call.1} parent=1 // pred_check_branch
      %56 = sbr.rel (0) target = $region65
    $region64: #{tpu_custom_call.1} parent=1 // pred_region
      _
    $region65: #{tpu_custom_call.1} parent=1 // pred_fallthru
      _
    // Predicated region
    $region66: #{tpu_custom_call.1} parent=1 // pred_check
      _
    $region67: #{tpu_custom_call.1} parent=1 // pred_check_branch
      %58 = sbr.rel (0) target = $region69
    $region68: #{tpu_custom_call.1} parent=1 // pred_region
      _
    $region69: #{tpu_custom_call.1} parent=1 // pred_fallthru
      _
    %v60 = vld [vmem:[%s0] sm:$0xf]
    %v61 = vld [vmem:[%s0 + $0x4] sm:$0xf]
    %v62 = vld [vmem:[%s2] sm:$0xf]
    %v63 = vld [vmem:[%s2 + $0x4] sm:$0xf]
    %v64 = vld [vmem:[%s2 + $0x8] sm:$0xf]
    %v65 = vld [vmem:[%s2 + $0xc] sm:$0xf]
    %v66 = vld [vmem:[%s2 + $0x10] sm:$0xf]
    %v67 = vld [vmem:[%s2 + $0x14] sm:$0xf]
    %v68 = vld [vmem:[%s2 + $0x18] sm:$0xf]
    %v69 = vld [vmem:[%s2 + $0x1c] sm:$0xf]
    %v70 = vld [vmem:[%s3] sm:$0x1]
    %v71 = vld [vmem:[%s4] sm:$0x1]
    %v72 = vld [vmem:[%s5] sm:$0x1]
    %v75 = vunpack.c.l.b16 %v60
    %v76 = vunpack.c.l.b16 %v61
    %v77 = vpack.c.b16 %v76, %v75
    %v86 = vunpack.c.l.b16 %v62
    %v87 = vunpack.c.l.b16 %v63
    %v88 = vunpack.c.l.b16 %v64
    %v89 = vunpack.c.l.b16 %v65
    %v90 = vunpack.c.l.b16 %v66
    %v91 = vunpack.c.l.b16 %v67
    %v92 = vunpack.c.l.b16 %v68
    %v93 = vunpack.c.l.b16 %v69
    %v94 = vpack.c.b16 %v87, %v86
    %v95 = vpack.c.b16 %v89, %v88
    %v96 = vpack.c.b16 %v91, %v90
    %v97 = vpack.c.b16 %v93, %v92
    %vm102 = vcmask 523264
    %v104 = vsel %vm102, %v77, 0
    %106 = vmatprep.subr.bf16.mxu0 0
    %107 = vmatpush1.bf16.msra.mxu0 0
    %108 = vmatprep.subr.bf16.mxu0 0
    %109 = vmatpush1.bf16.msra.mxu0 0
    %110 = vmatprep.subr.bf16.mxu0 0
    %111 = vmatpush1.bf16.msra.mxu0 0
    %112 = vmatprep.subr.bf16.mxu0 0
    %113 = vmatpush1.bf16.msra.mxu0 0
    %114 = vmatprep.subr.bf16.mxu0 0
    %115 = vmatpush1.bf16.msra.mxu0 %v97
    %116 = vmatprep.subr.bf16.mxu0 0
    %117 = vmatpush1.bf16.msra.mxu0 %v96
    %118 = vmatprep.subr.bf16.mxu0 0
    %119 = vmatpush1.bf16.msra.mxu0 %v95
    %120 = vmatprep.subr.bf16.mxu0 0
    %121 = vmatpush1.bf16.msra.mxu0 %v94
    %122 = vmatprep.subr.bf16.mxu0 0
    %123 = vmatpush2.bf16.msra.mxu0 0
    %124 = vmatprep.subr.bf16.mxu0 0
    %125 = vmatpush2.bf16.msra.mxu0 0
    %126 = vmatprep.subr.bf16.mxu0 0
    %127 = vmatpush2.bf16.msra.mxu0 0
    %128 = vmatprep.subr.bf16.mxu0 0
    %129 = vmatpush2.bf16.msra.mxu0 0
    %130 = vmatprep.subr.bf16.mxu0 0
    %131 = vmatpush2.bf16.msra.mxu0 0
    %132 = vmatprep.subr.bf16.mxu0 0
    %133 = vmatpush2.bf16.msra.mxu0 0
    %134 = vmatprep.subr.bf16.mxu0 0
    %135 = vmatpush2.bf16.msra.mxu0 0
    %136 = vmatprep.subr.bf16.mxu0 0
    %137 = vmatpush2.bf16.msra.mxu0 0
    %138 = vmatprep.mubr.bf16.mxu0 0
    %139 = vmatmul.mubr.bf16.gmra.mxu0 %v104
    %v140 = vpop.f32.mrf.mxu0
    %v141 = vadd.f32 0.0, %v140
    %v142 = vpop.f32.mrf.mxu0
    %v143 = vpop.f32.mrf.mxu0
    %v144 = vadd.f32 0.0, %v143
    %v145 = vpop.f32.mrf.mxu0
    %146 = vdwg.mxu0
    %v148 = vlaneseq
    %v149 = vshrl.u32 %v148, 7
    %v150 = vsub.s32 0, %v149
    %v151 = vrot.slane %v70, %v150
    %v153 = vmul.f32 %v141, %v151
    %v154 = vmul.f32 %v144, %v151
    %vm155 = vcmask 261120
    %v156 = vsel %vm155, %v153, 0.0
    %157 = vadd.xlane.f32.xlu0 %v156
    %v158 = vpop.xlane.xlu0 %157
    %v159 = vsel %vm155, %v154, 0.0
    %160 = vadd.xlane.f32.xlu0 %v159
    %v161 = vpop.xlane.xlu0 %160
    %v163 = vsel %vm155, %v71, 0
    %v166 = vsel %vm155, %v141, 0
    %v169 = vsel %vm155, %v144, 0
    %171 = vmatprep.subr.mxu0 0.0
    %172 = vmatpush1.xpose.msra.mxu0 0.0
    %173 = vmatprep.subr.mxu0 0.0
    %174 = vmatpush1.xpose.msra.mxu0 0.0
    %175 = vmatprep.subr.mxu0 0.0
    %176 = vmatpush1.xpose.msra.mxu0 0.0
    %177 = vmatprep.subr.mxu0 0.0
    %178 = vmatpush1.xpose.msra.mxu0 0.0
    %179 = vmatprep.subr.mxu0 0.0
    %180 = vmatpush1.xpose.msra.mxu0 0.0
    %181 = vmatprep.subr.mxu0 0.0
    %182 = vmatpush1.xpose.msra.mxu0 0.0
    %183 = vmatprep.subr.mxu0 0.0
    %184 = vmatpush1.xpose.msra.mxu0 0.0
    %185 = vmatprep.subr.mxu0 0.0
    %186 = vmatpush1.xpose.msra.mxu0 0.0
    %187 = vmatprep.subr.mxu0 0.0
    %188 = vmatpush1.xpose.msra.mxu0 0.0
    %189 = vmatprep.subr.mxu0 0.0
    %190 = vmatpush1.xpose.msra.mxu0 0.0
    %191 = vmatprep.subr.mxu0 0.0
    %192 = vmatpush1.xpose.msra.mxu0 0.0
    %193 = vmatprep.subr.mxu0 0.0
    %194 = vmatpush1.xpose.msra.mxu0 0.0
    %195 = vmatprep.subr.mxu0 0.0
    %196 = vmatpush1.xpose.msra.mxu0 0.0
    %197 = vmatprep.subr.mxu0 0.0
    %198 = vmatpush1.xpose.msra.mxu0 0.0
    %199 = vmatprep.subr.mxu0 0.0
    %200 = vmatpush1.xpose.msra.mxu0 %v169
    %201 = vmatprep.subr.mxu0 0.0
    %202 = vmatpush1.xpose.msra.mxu0 %v166
    %203 = vmatprep.subr.mxu0 0.0
    %204 = vmatpush2.xpose.msra.mxu0 0.0
    %205 = vmatprep.subr.mxu0 0.0
    %206 = vmatpush2.xpose.msra.mxu0 0.0
    %207 = vmatprep.subr.mxu0 0.0
    %208 = vmatpush2.xpose.msra.mxu0 0.0
    %209 = vmatprep.subr.mxu0 0.0
    %210 = vmatpush2.xpose.msra.mxu0 0.0
    %211 = vmatprep.subr.mxu0 0.0
    %212 = vmatpush2.xpose.msra.mxu0 0.0
    %213 = vmatprep.subr.mxu0 0.0
    %214 = vmatpush2.xpose.msra.mxu0 0.0
    %215 = vmatprep.subr.mxu0 0.0
    %216 = vmatpush2.xpose.msra.mxu0 0.0
    %217 = vmatprep.subr.mxu0 0.0
    %218 = vmatpush2.xpose.msra.mxu0 0.0
    %219 = vmatprep.subr.mxu0 0.0
    %220 = vmatpush2.xpose.msra.mxu0 0.0
    %221 = vmatprep.subr.mxu0 0.0
    %222 = vmatpush2.xpose.msra.mxu0 0.0
    %223 = vmatprep.subr.mxu0 0.0
    %224 = vmatpush2.xpose.msra.mxu0 0.0
    %225 = vmatprep.subr.mxu0 0.0
    %226 = vmatpush2.xpose.msra.mxu0 0.0
    %227 = vmatprep.subr.mxu0 0.0
    %228 = vmatpush2.xpose.msra.mxu0 0.0
    %229 = vmatprep.subr.mxu0 0.0
    %230 = vmatpush2.xpose.msra.mxu0 0.0
    %231 = vmatprep.subr.mxu0 0.0
    %232 = vmatpush2.xpose.msra.mxu0 0.0
    %233 = vmatprep.subr.mxu0 0.0
    %234 = vmatpush2.xpose.msra.mxu0 0.0
    %235 = vmatprep.mubr.f32.mxu0 0.0
    %236 = vmatmul.mubr.f32.gmra.mxu0 %v163
    %v237 = vpop.f32.mrf.mxu0
    %v238 = vadd.f32 0.0, %v237
    %v239 = vpop.f32.mrf.mxu0
    %240 = vdwg.mxu0
    %v241 = vlaneseq
    %v242 = vshrl.u32 %v241, 7
    %v243 = vsub.s32 0, %v242
    %v244 = vrot.slane %v238, %v243
    %v245 = vadd.f32 %v158, %v244
    %v246 = vadd.f32 %v161, %v244
    %v247 = vmul.f32 %v245, 0.2
    %v248 = vmul.f32 %v246, 0.2
    %v249 = vmax.f32 %v245, %v247
    %v250 = vmax.f32 %v246, %v248
    %v251 = vld [vmem:[%s1] sm:$0xf]
    %v252 = vld [vmem:[%s1 + $0x4] sm:$0xf]
    %v253 = vunpack.c.l.bf16 %v251
    %v254 = vunpack.c.l.bf16 %v252
    %v255 = vadd.f32 %v249, %v253
    %v256 = vadd.f32 %v250, %v254
    %vm257 = vcmask 130048
    %v258 = vsel %vm257, %v255, -inf
    %259 = vmax.xlane.f32.xlu0 %v258
    %v260 = vpop.xlane.xlu0 %259
    %v261 = vsel %vm257, %v256, -inf
    %262 = vmax.xlane.f32.xlu0 %v261
    %v263 = vpop.xlane.xlu0 %262
    %v264 = vsub.f32 %v255, %v260
    %v265 = vsub.f32 %v256, %v263
    %v266 = vmul.f32 %v264, 1.442695
    %v267 = vpow.pop %v266
    %v268 = vmul.f32 %v265, 1.442695
    %v269 = vpow.pop %v268
    %v270 = vsel %vm257, %v267, 0.0
    %271 = vadd.xlane.f32.xlu0 %v270
    %v272 = vpop.xlane.xlu0 %271
    %v273 = vsel %vm257, %v269, 0.0
    %274 = vadd.xlane.f32.xlu0 %v273
    %v275 = vpop.xlane.xlu0 %274
    %v276 = vpack.c.bf16 %v269, %v267
    %v277 = vpack.c.bf16 %v144, %v141
    %v279 = vsel %vm257, %v276, 0
    %281 = vmatprep.subr.bf16.mxu0 0
    %282 = vmatpush1.bf16.msra.mxu0 0
    %283 = vmatprep.subr.bf16.mxu0 0
    %284 = vmatpush1.bf16.msra.mxu0 0
    %285 = vmatprep.subr.bf16.mxu0 0
    %286 = vmatpush1.bf16.msra.mxu0 0
    %287 = vmatprep.subr.bf16.mxu0 0
    %288 = vmatpush1.bf16.msra.mxu0 0
    %289 = vmatprep.subr.bf16.mxu0 0
    %290 = vmatpush1.bf16.msra.mxu0 0
    %291 = vmatprep.subr.bf16.mxu0 0
    %292 = vmatpush1.bf16.msra.mxu0 0
    %293 = vmatprep.subr.bf16.mxu0 0
    %294 = vmatpush1.bf16.msra.mxu0 0
    %295 = vmatprep.subr.bf16.mxu0 0
    %296 = vmatpush1.bf16.msra.mxu0 %v277
    %297 = vmatprep.subr.bf16.mxu0 0
    %298 = vmatpush2.bf16.msra.mxu0 0
    %299 = vmatprep.subr.bf16.mxu0 0
    %300 = vmatpush2.bf16.msra.mxu0 0
    %301 = vmatprep.subr.bf16.mxu0 0
    %302 = vmatpush2.bf16.msra.mxu0 0
    %303 = vmatprep.subr.bf16.mxu0 0
    %304 = vmatpush2.bf16.msra.mxu0 0
    %305 = vmatprep.subr.bf16.mxu0 0
    %306 = vmatpush2.bf16.msra.mxu0 0
    %307 = vmatprep.subr.bf16.mxu0 0
    %308 = vmatpush2.bf16.msra.mxu0 0
    %309 = vmatprep.subr.bf16.mxu0 0
    %310 = vmatpush2.bf16.msra.mxu0 0
    %311 = vmatprep.subr.bf16.mxu0 0
    %312 = vmatpush2.bf16.msra.mxu0 0
    %313 = vmatprep.mubr.bf16.mxu0 0
    %314 = vmatmul.mubr.bf16.gmra.mxu0 %v279
    %v315 = vpop.f32.mrf.mxu0
    %v316 = vadd.f32 0.0, %v315
    %v317 = vpop.f32.mrf.mxu0
    %v318 = vpop.f32.mrf.mxu0
    %v319 = vadd.f32 0.0, %v318
    %v320 = vpop.f32.mrf.mxu0
    %321 = vdwg.mxu0
    %v322 = vrcp.pop %v272
    %v323 = vrcp.pop %v275
    %v324 = vmul.f32 %v316, %v322
    %v325 = vmul.f32 %v319, %v323
    %326 = vrot.lane.b32.xlu0 %v141, 96
    %v327 = vpop.permute.xlu0 %326
    %328 = vrot.lane.b32.xlu0 %v144, 96
    %v329 = vpop.permute.xlu0 %328
    %v332 = vadd.f32 %v324, %v327
    %v333 = vadd.f32 %v325, %v329
    %v335 = vlaneseq
    %v336 = vshrl.u32 %v335, 7
    %v337 = vsub.s32 0, %v336
    %v338 = vrot.slane %v72, %v337
    %v340 = vadd.f32 %v332, %v338
    %v341 = vadd.f32 %v333, %v338
    %v342 = vmax.f32 %v340, 0.0
    %v343 = vmax.f32 %v341, 0.0
    %v344 = vpack.c.bf16 %v343, %v342
    %v345 = vld [vmem:[%s6] sm:$0xf]
    %v346 = vld [vmem:[%s6 + $0x4] sm:$0xf]
    %v347 = vld [vmem:[%s6 + $0x8] sm:$0xf]
    %v348 = vld [vmem:[%s6 + $0xc] sm:$0xf]
    %v349 = vld [vmem:[%s7] sm:$0x1]
    %v350 = vld [vmem:[%s8] sm:$0x1]
    %v351 = vld [vmem:[%s9] sm:$0x1]
    %v356 = vunpack.c.l.b16 %v345
    %v357 = vunpack.c.l.b16 %v346
    %v358 = vunpack.c.l.b16 %v347
    %v359 = vunpack.c.l.b16 %v348
    %v360 = vpack.c.b16 %v357, %v356
    %v361 = vpack.c.b16 %v359, %v358
    %v365 = vsel %vm155, %v344, 0
    %367 = vmatprep.subr.bf16.mxu0 0
    %368 = vmatpush1.bf16.msra.mxu0 0
    %369 = vmatprep.subr.bf16.mxu0 0
    %370 = vmatpush1.bf16.msra.mxu0 0
    %371 = vmatprep.subr.bf16.mxu0 0
    %372 = vmatpush1.bf16.msra.mxu0 0
    %373 = vmatprep.subr.bf16.mxu0 0
    %374 = vmatpush1.bf16.msra.mxu0 0
    %375 = vmatprep.subr.bf16.mxu0 0
    %376 = vmatpush1.bf16.msra.mxu0 0
    %377 = vmatprep.subr.bf16.mxu0 0
    %378 = vmatpush1.bf16.msra.mxu0 0
    %379 = vmatprep.subr.bf16.mxu0 0
    %380 = vmatpush1.bf16.msra.mxu0 %v361
    %381 = vmatprep.subr.bf16.mxu0 0
    %382 = vmatpush1.bf16.msra.mxu0 %v360
    %383 = vmatprep.subr.bf16.mxu0 0
    %384 = vmatpush2.bf16.msra.mxu0 0
    %385 = vmatprep.subr.bf16.mxu0 0
    %386 = vmatpush2.bf16.msra.mxu0 0
    %387 = vmatprep.subr.bf16.mxu0 0
    %388 = vmatpush2.bf16.msra.mxu0 0
    %389 = vmatprep.subr.bf16.mxu0 0
    %390 = vmatpush2.bf16.msra.mxu0 0
    %391 = vmatprep.subr.bf16.mxu0 0
    %392 = vmatpush2.bf16.msra.mxu0 0
    %393 = vmatprep.subr.bf16.mxu0 0
    %394 = vmatpush2.bf16.msra.mxu0 0
    %395 = vmatprep.subr.bf16.mxu0 0
    %396 = vmatpush2.bf16.msra.mxu0 0
    %397 = vmatprep.subr.bf16.mxu0 0
    %398 = vmatpush2.bf16.msra.mxu0 0
    %399 = vmatprep.mubr.bf16.mxu0 0
    %400 = vmatmul.mubr.bf16.gmra.mxu0 %v365
    %v401 = vpop.f32.mrf.mxu0
    %v402 = vadd.f32 0.0, %v401
    %v403 = vpop.f32.mrf.mxu0
    %v404 = vpop.f32.mrf.mxu0
    %v405 = vadd.f32 0.0, %v404
    %v406 = vpop.f32.mrf.mxu0
    %407 = vdwg.mxu0
    %v409 = vlaneseq
    %v410 = vshrl.u32 %v409, 7
    %v411 = vsub.s32 0, %v410
    %v412 = vrot.slane %v349, %v411
    %v414 = vmul.f32 %v402, %v412
    %v415 = vmul.f32 %v405, %v412
    %v416 = vsel %vm155, %v414, 0.0
    %417 = vadd.xlane.f32.xlu0 %v416
    %v418 = vpop.xlane.xlu0 %417
    %v419 = vsel %vm155, %v415, 0.0
    %420 = vadd.xlane.f32.xlu0 %v419
    %v421 = vpop.xlane.xlu0 %420
    %v423 = vsel %vm155, %v350, 0
    %v426 = vsel %vm155, %v402, 0
    %v429 = vsel %vm155, %v405, 0
    %431 = vmatprep.subr.mxu0 0.0
    %432 = vmatpush1.xpose.msra.mxu0 0.0
    %433 = vmatprep.subr.mxu0 0.0
    %434 = vmatpush1.xpose.msra.mxu0 0.0
    %435 = vmatprep.subr.mxu0 0.0
    %436 = vmatpush1.xpose.msra.mxu0 0.0
    %437 = vmatprep.subr.mxu0 0.0
    %438 = vmatpush1.xpose.msra.mxu0 0.0
    %439 = vmatprep.subr.mxu0 0.0
    %440 = vmatpush1.xpose.msra.mxu0 0.0
    %441 = vmatprep.subr.mxu0 0.0
    %442 = vmatpush1.xpose.msra.mxu0 0.0
    %443 = vmatprep.subr.mxu0 0.0
    %444 = vmatpush1.xpose.msra.mxu0 0.0
    %445 = vmatprep.subr.mxu0 0.0
    %446 = vmatpush1.xpose.msra.mxu0 0.0
    %447 = vmatprep.subr.mxu0 0.0
    %448 = vmatpush1.xpose.msra.mxu0 0.0
    %449 = vmatprep.subr.mxu0 0.0
    %450 = vmatpush1.xpose.msra.mxu0 0.0
    %451 = vmatprep.subr.mxu0 0.0
    %452 = vmatpush1.xpose.msra.mxu0 0.0
    %453 = vmatprep.subr.mxu0 0.0
    %454 = vmatpush1.xpose.msra.mxu0 0.0
    %455 = vmatprep.subr.mxu0 0.0
    %456 = vmatpush1.xpose.msra.mxu0 0.0
    %457 = vmatprep.subr.mxu0 0.0
    %458 = vmatpush1.xpose.msra.mxu0 0.0
    %459 = vmatprep.subr.mxu0 0.0
    %460 = vmatpush1.xpose.msra.mxu0 %v429
    %461 = vmatprep.subr.mxu0 0.0
    %462 = vmatpush1.xpose.msra.mxu0 %v426
    %463 = vmatprep.subr.mxu0 0.0
    %464 = vmatpush2.xpose.msra.mxu0 0.0
    %465 = vmatprep.subr.mxu0 0.0
    %466 = vmatpush2.xpose.msra.mxu0 0.0
    %467 = vmatprep.subr.mxu0 0.0
    %468 = vmatpush2.xpose.msra.mxu0 0.0
    %469 = vmatprep.subr.mxu0 0.0
    %470 = vmatpush2.xpose.msra.mxu0 0.0
    %471 = vmatprep.subr.mxu0 0.0
    %472 = vmatpush2.xpose.msra.mxu0 0.0
    %473 = vmatprep.subr.mxu0 0.0
    %474 = vmatpush2.xpose.msra.mxu0 0.0
    %475 = vmatprep.subr.mxu0 0.0
    %476 = vmatpush2.xpose.msra.mxu0 0.0
    %477 = vmatprep.subr.mxu0 0.0
    %478 = vmatpush2.xpose.msra.mxu0 0.0
    %479 = vmatprep.subr.mxu0 0.0
    %480 = vmatpush2.xpose.msra.mxu0 0.0
    %481 = vmatprep.subr.mxu0 0.0
    %482 = vmatpush2.xpose.msra.mxu0 0.0
    %483 = vmatprep.subr.mxu0 0.0
    %484 = vmatpush2.xpose.msra.mxu0 0.0
    %485 = vmatprep.subr.mxu0 0.0
    %486 = vmatpush2.xpose.msra.mxu0 0.0
    %487 = vmatprep.subr.mxu0 0.0
    %488 = vmatpush2.xpose.msra.mxu0 0.0
    %489 = vmatprep.subr.mxu0 0.0
    %490 = vmatpush2.xpose.msra.mxu0 0.0
    %491 = vmatprep.subr.mxu0 0.0
    %492 = vmatpush2.xpose.msra.mxu0 0.0
    %493 = vmatprep.subr.mxu0 0.0
    %494 = vmatpush2.xpose.msra.mxu0 0.0
    %495 = vmatprep.mubr.f32.mxu0 0.0
    %496 = vmatmul.mubr.f32.gmra.mxu0 %v423
    %v497 = vpop.f32.mrf.mxu0
    %v498 = vadd.f32 0.0, %v497
    %v499 = vpop.f32.mrf.mxu0
    %500 = vdwg.mxu0
    %v501 = vlaneseq
    %v502 = vshrl.u32 %v501, 7
    %v503 = vsub.s32 0, %v502
    %v504 = vrot.slane %v498, %v503
    %v505 = vadd.f32 %v418, %v504
    %v506 = vadd.f32 %v421, %v504
    %v507 = vmul.f32 %v505, 0.2
    %v508 = vmul.f32 %v506, 0.2
    %v509 = vmax.f32 %v505, %v507
    %v510 = vmax.f32 %v506, %v508
    %v511 = vadd.f32 %v509, %v253
    %v512 = vadd.f32 %v510, %v254
    %v513 = vsel %vm257, %v511, -inf
    %514 = vmax.xlane.f32.xlu0 %v513
    %v515 = vpop.xlane.xlu0 %514
    %v516 = vsel %vm257, %v512, -inf
    %517 = vmax.xlane.f32.xlu0 %v516
    %v518 = vpop.xlane.xlu0 %517
    %v519 = vsub.f32 %v511, %v515
    %v520 = vsub.f32 %v512, %v518
    %v521 = vmul.f32 %v519, 1.442695
    %v522 = vpow.pop %v521
    %v523 = vmul.f32 %v520, 1.442695
    %v524 = vpow.pop %v523
    %v525 = vsel %vm257, %v522, 0.0
    %526 = vadd.xlane.f32.xlu0 %v525
    %v527 = vpop.xlane.xlu0 %526
    %v528 = vsel %vm257, %v524, 0.0
    %529 = vadd.xlane.f32.xlu0 %v528
    %v530 = vpop.xlane.xlu0 %529
    %v531 = vpack.c.bf16 %v524, %v522
    %v532 = vpack.c.bf16 %v405, %v402
    %v534 = vsel %vm257, %v531, 0
    %536 = vmatprep.subr.bf16.mxu0 0
    %537 = vmatpush1.bf16.msra.mxu0 0
    %538 = vmatprep.subr.bf16.mxu0 0
    %539 = vmatpush1.bf16.msra.mxu0 0
    %540 = vmatprep.subr.bf16.mxu0 0
    %541 = vmatpush1.bf16.msra.mxu0 0
    %542 = vmatprep.subr.bf16.mxu0 0
    %543 = vmatpush1.bf16.msra.mxu0 0
    %544 = vmatprep.subr.bf16.mxu0 0
    %545 = vmatpush1.bf16.msra.mxu0 0
    %546 = vmatprep.subr.bf16.mxu0 0
    %547 = vmatpush1.bf16.msra.mxu0 0
    %548 = vmatprep.subr.bf16.mxu0 0
    %549 = vmatpush1.bf16.msra.mxu0 0
    %550 = vmatprep.subr.bf16.mxu0 0
    %551 = vmatpush1.bf16.msra.mxu0 %v532
    %552 = vmatprep.subr.bf16.mxu0 0
    %553 = vmatpush2.bf16.msra.mxu0 0
    %554 = vmatprep.subr.bf16.mxu0 0
    %555 = vmatpush2.bf16.msra.mxu0 0
    %556 = vmatprep.subr.bf16.mxu0 0
    %557 = vmatpush2.bf16.msra.mxu0 0
    %558 = vmatprep.subr.bf16.mxu0 0
    %559 = vmatpush2.bf16.msra.mxu0 0
    %560 = vmatprep.subr.bf16.mxu0 0
    %561 = vmatpush2.bf16.msra.mxu0 0
    %562 = vmatprep.subr.bf16.mxu0 0
    %563 = vmatpush2.bf16.msra.mxu0 0
    %564 = vmatprep.subr.bf16.mxu0 0
    %565 = vmatpush2.bf16.msra.mxu0 0
    %566 = vmatprep.subr.bf16.mxu0 0
    %567 = vmatpush2.bf16.msra.mxu0 0
    %568 = vmatprep.mubr.bf16.mxu0 0
    %569 = vmatmul.mubr.bf16.gmra.mxu0 %v534
    %v570 = vpop.f32.mrf.mxu0
    %v571 = vadd.f32 0.0, %v570
    %v572 = vpop.f32.mrf.mxu0
    %v573 = vpop.f32.mrf.mxu0
    %v574 = vadd.f32 0.0, %v573
    %v575 = vpop.f32.mrf.mxu0
    %576 = vdwg.mxu0
    %v577 = vrcp.pop %v527
    %v578 = vrcp.pop %v530
    %v579 = vmul.f32 %v571, %v577
    %v580 = vmul.f32 %v574, %v578
    %581 = vrot.lane.b32.xlu0 %v402, 96
    %v582 = vpop.permute.xlu0 %581
    %583 = vrot.lane.b32.xlu0 %v405, 96
    %v584 = vpop.permute.xlu0 %583
    %v587 = vadd.f32 %v579, %v582
    %v588 = vadd.f32 %v580, %v584
    %v590 = vlaneseq
    %v591 = vshrl.u32 %v590, 7
    %v592 = vsub.s32 0, %v591
    %v593 = vrot.slane %v351, %v592
    %v595 = vadd.f32 %v587, %v593
    %v596 = vadd.f32 %v588, %v593
    %v597 = vld [vmem:[%s10] sm:$0xf]
    %v598 = vpack.c.bf16 %v596, %v595
    %v600 = vsel %vm257, %v597, 0
    %602 = vmatprep.subr.bf16.mxu0 0
    %603 = vmatpush1.bf16.msra.mxu0 0
    %604 = vmatprep.subr.bf16.mxu0 0
    %605 = vmatpush1.bf16.msra.mxu0 0
    %606 = vmatprep.subr.bf16.mxu0 0
    %607 = vmatpush1.bf16.msra.mxu0 0
    %608 = vmatprep.subr.bf16.mxu0 0
    %609 = vmatpush1.bf16.msra.mxu0 0
    %610 = vmatprep.subr.bf16.mxu0 0
    %611 = vmatpush1.bf16.msra.mxu0 0
    %612 = vmatprep.subr.bf16.mxu0 0
    %613 = vmatpush1.bf16.msra.mxu0 0
    %614 = vmatprep.subr.bf16.mxu0 0
    %615 = vmatpush1.bf16.msra.mxu0 0
    %616 = vmatprep.subr.bf16.mxu0 0
    %617 = vmatpush1.bf16.msra.mxu0 %v598
    %618 = vmatprep.subr.bf16.mxu0 0
    %619 = vmatpush2.bf16.msra.mxu0 0
    %620 = vmatprep.subr.bf16.mxu0 0
    %621 = vmatpush2.bf16.msra.mxu0 0
    %622 = vmatprep.subr.bf16.mxu0 0
    %623 = vmatpush2.bf16.msra.mxu0 0
    %624 = vmatprep.subr.bf16.mxu0 0
    %625 = vmatpush2.bf16.msra.mxu0 0
    %626 = vmatprep.subr.bf16.mxu0 0
    %627 = vmatpush2.bf16.msra.mxu0 0
    %628 = vmatprep.subr.bf16.mxu0 0
    %629 = vmatpush2.bf16.msra.mxu0 0
    %630 = vmatprep.subr.bf16.mxu0 0
    %631 = vmatpush2.bf16.msra.mxu0 0
    %632 = vmatprep.subr.bf16.mxu0 0
    %633 = vmatpush2.bf16.msra.mxu0 0
    %634 = vmatprep.mubr.bf16.mxu0 0
    %635 = vmatmul.mubr.bf16.gmra.mxu0 %v600
    %v636 = vpop.f32.mrf.mxu0
    %v637 = vadd.f32 0.0, %v636
    %v638 = vpop.f32.mrf.mxu0
    %v639 = vpop.f32.mrf.mxu0
    %v640 = vpop.f32.mrf.mxu0
    %641 = vdwg.mxu0
    %v642 = vpack.c.bf16 %v637, %v637
    %v643 = vld [vmem:[%s14] sm:$0xf]
    %v644 = vld [vmem:[%s14 + $0x4] sm:$0xf]
    %v645 = vld [vmem:[%s14 + $0x8] sm:$0xf]
    %v646 = vld [vmem:[%s14 + $0xc] sm:$0xf]
    %v647 = vld [vmem:[%s11] sm:$0xff]
    %v648 = vld [vmem:[%s11 + $0x8] sm:$0xff]
    %v649 = vld [vmem:[%s11 + $0x10] sm:$0xff]
    %v650 = vld [vmem:[%s12] sm:$0xf]
    %v651 = vld [vmem:[%s12 + $0x4] sm:$0xf]
    %v652 = vld [vmem:[%s12 + $0x8] sm:$0xf]
    %v653 = vld [vmem:[%s12 + $0xc] sm:$0xf]
    %v654 = vld [vmem:[%s12 + $0x10] sm:$0xf]
    %v655 = vld [vmem:[%s12 + $0x14] sm:$0xf]
    %v656 = vld [vmem:[%s12 + $0x18] sm:$0xf]
    %v657 = vld [vmem:[%s12 + $0x1c] sm:$0xf]
    %v658 = vld [vmem:[%s12 + $0x20] sm:$0xf]
    %v659 = vld [vmem:[%s12 + $0x24] sm:$0xf]
    %v660 = vld [vmem:[%s12 + $0x28] sm:$0xf]
    %v661 = vld [vmem:[%s12 + $0x2c] sm:$0xf]
    %v662 = vld [vmem:[%s12 + $0x30] sm:$0xf]
    %v663 = vld [vmem:[%s12 + $0x34] sm:$0xf]
    %v664 = vld [vmem:[%s12 + $0x38] sm:$0xf]
    %v665 = vld [vmem:[%s12 + $0x3c] sm:$0xf]
    %v666 = vld [vmem:[%s12 + $0x40] sm:$0xf]
    %v667 = vld [vmem:[%s12 + $0x44] sm:$0xf]
    %v668 = vld [vmem:[%s12 + $0x48] sm:$0xf]
    %v669 = vld [vmem:[%s12 + $0x4c] sm:$0xf]
    %v670 = vld [vmem:[%s12 + $0x50] sm:$0xf]
    %v671 = vld [vmem:[%s12 + $0x54] sm:$0xf]
    %v672 = vld [vmem:[%s12 + $0x58] sm:$0xf]
    %v673 = vld [vmem:[%s12 + $0x5c] sm:$0xf]
    %v674 = vld [vmem:[%s12 + $0x60] sm:$0xf]
    %v675 = vld [vmem:[%s12 + $0x64] sm:$0xf]
    %v676 = vld [vmem:[%s12 + $0x68] sm:$0xf]
    %v677 = vld [vmem:[%s12 + $0x6c] sm:$0xf]
    %v678 = vld [vmem:[%s12 + $0x70] sm:$0xf]
    %v679 = vld [vmem:[%s12 + $0x74] sm:$0xf]
    %v680 = vld [vmem:[%s12 + $0x78] sm:$0xf]
    %v681 = vld [vmem:[%s12 + $0x7c] sm:$0xf]
    %v682 = vld [vmem:[%s12 + $0x80] sm:$0xf]
    %v683 = vld [vmem:[%s12 + $0x84] sm:$0xf]
    %v684 = vld [vmem:[%s12 + $0x88] sm:$0xf]
    %v685 = vld [vmem:[%s12 + $0x8c] sm:$0xf]
    %v686 = vld [vmem:[%s12 + $0x90] sm:$0xf]
    %v687 = vld [vmem:[%s12 + $0x94] sm:$0xf]
    %v688 = vld [vmem:[%s12 + $0x98] sm:$0xf]
    %v689 = vld [vmem:[%s12 + $0x9c] sm:$0xf]
    %v690 = vld [vmem:[%s12 + $0xa0] sm:$0xf]
    %v691 = vld [vmem:[%s12 + $0xa4] sm:$0xf]
    %v692 = vld [vmem:[%s12 + $0xa8] sm:$0xf]
    %v693 = vld [vmem:[%s12 + $0xac] sm:$0xf]
    %v694 = vld [vmem:[%s12 + $0xb0] sm:$0xf]
    %v695 = vld [vmem:[%s12 + $0xb4] sm:$0xf]
    %v696 = vld [vmem:[%s12 + $0xb8] sm:$0xf]
    %v697 = vld [vmem:[%s12 + $0xbc] sm:$0xf]
    %v698 = vld [vmem:[%s12 + $0xc0] sm:$0xf]
    %v699 = vld [vmem:[%s12 + $0xc4] sm:$0xf]
    %v700 = vld [vmem:[%s12 + $0xc8] sm:$0xf]
    %v701 = vld [vmem:[%s12 + $0xcc] sm:$0xf]
    %v702 = vld [vmem:[%s12 + $0xd0] sm:$0xf]
    %v703 = vld [vmem:[%s12 + $0xd4] sm:$0xf]
    %v704 = vld [vmem:[%s12 + $0xd8] sm:$0xf]
    %v705 = vld [vmem:[%s12 + $0xdc] sm:$0xf]
    %v706 = vld [vmem:[%s12 + $0xe0] sm:$0xf]
    %v707 = vld [vmem:[%s12 + $0xe4] sm:$0xf]
    %v708 = vld [vmem:[%s12 + $0xe8] sm:$0xf]
    %v709 = vld [vmem:[%s12 + $0xec] sm:$0xf]
    %v710 = vld [vmem:[%s12 + $0xf0] sm:$0xf]
    %v711 = vld [vmem:[%s12 + $0xf4] sm:$0xf]
    %v712 = vld [vmem:[%s12 + $0xf8] sm:$0xf]
    %v713 = vld [vmem:[%s12 + $0xfc] sm:$0xf]
    %v714 = vld [vmem:[%s12 + $0x100] sm:$0xf]
    %v715 = vld [vmem:[%s12 + $0x104] sm:$0xf]
    %v716 = vld [vmem:[%s12 + $0x108] sm:$0xf]
    %v717 = vld [vmem:[%s12 + $0x10c] sm:$0xf]
    %v718 = vld [vmem:[%s12 + $0x110] sm:$0xf]
    %v719 = vld [vmem:[%s12 + $0x114] sm:$0xf]
    %v720 = vld [vmem:[%s12 + $0x118] sm:$0xf]
    %v721 = vld [vmem:[%s12 + $0x11c] sm:$0xf]
    %v722 = vld [vmem:[%s12 + $0x120] sm:$0xf]
    %v723 = vld [vmem:[%s12 + $0x124] sm:$0xf]
    %v724 = vld [vmem:[%s12 + $0x128] sm:$0xf]
    %v725 = vld [vmem:[%s12 + $0x12c] sm:$0xf]
    %v726 = vld [vmem:[%s12 + $0x130] sm:$0xf]
    %v727 = vld [vmem:[%s12 + $0x134] sm:$0xf]
    %v728 = vld [vmem:[%s12 + $0x138] sm:$0xf]
    %v729 = vld [vmem:[%s12 + $0x13c] sm:$0xf]
    %v730 = vld [vmem:[%s12 + $0x140] sm:$0xf]
    %v731 = vld [vmem:[%s12 + $0x144] sm:$0xf]
    %v732 = vld [vmem:[%s12 + $0x148] sm:$0xf]
    %v733 = vld [vmem:[%s12 + $0x14c] sm:$0xf]
    %v734 = vld [vmem:[%s12 + $0x150] sm:$0xf]
    %v735 = vld [vmem:[%s12 + $0x154] sm:$0xf]
    %v736 = vld [vmem:[%s12 + $0x158] sm:$0xf]
    %v737 = vld [vmem:[%s12 + $0x15c] sm:$0xf]
    %v738 = vld [vmem:[%s12 + $0x160] sm:$0xf]
    %v739 = vld [vmem:[%s12 + $0x164] sm:$0xf]
    %v740 = vld [vmem:[%s12 + $0x168] sm:$0xf]
    %v741 = vld [vmem:[%s12 + $0x16c] sm:$0xf]
    %v742 = vld [vmem:[%s12 + $0x170] sm:$0xf]
    %v743 = vld [vmem:[%s12 + $0x174] sm:$0xf]
    %v744 = vld [vmem:[%s12 + $0x178] sm:$0xf]
    %v745 = vld [vmem:[%s12 + $0x17c] sm:$0xf]
    %v749 = vunpack.c.l.b16 %v647
    %v750 = vunpack.c.h.b16 %v647
    %v751 = vunpack.c.l.b16 %v648
    %v752 = vunpack.c.h.b16 %v648
    %v753 = vunpack.c.l.b16 %v649
    %v754 = vunpack.c.h.b16 %v649
    %v755 = vpack.c.b16 %v749, %v749
    %v756 = vpack.c.b16 %v750, %v750
    %v757 = vpack.c.b16 %v751, %v751
    %v758 = vpack.c.b16 %v752, %v752
    %v759 = vpack.c.b16 %v753, %v753
    %v760 = vpack.c.b16 %v754, %v754
    %v863 = vunpack.c.l.b16 %v650
    %v864 = vunpack.c.l.b16 %v651
    %v865 = vunpack.c.l.b16 %v652
    %v866 = vunpack.c.l.b16 %v653
    %v867 = vunpack.c.l.b16 %v654
    %v868 = vunpack.c.l.b16 %v655
    %v869 = vunpack.c.l.b16 %v656
    %v870 = vunpack.c.l.b16 %v657
    %v871 = vunpack.c.l.b16 %v658
    %v872 = vunpack.c.l.b16 %v659
    %v873 = vunpack.c.l.b16 %v660
    %v874 = vunpack.c.l.b16 %v661
    %v875 = vunpack.c.l.b16 %v662
    %v876 = vunpack.c.l.b16 %v663
    %v877 = vunpack.c.l.b16 %v664
    %v878 = vunpack.c.l.b16 %v665
    %v879 = vunpack.c.l.b16 %v666
    %v880 = vunpack.c.l.b16 %v667
    %v881 = vunpack.c.l.b16 %v668
    %v882 = vunpack.c.l.b16 %v669
    %v883 = vunpack.c.l.b16 %v670
    %v884 = vunpack.c.l.b16 %v671
    %v885 = vunpack.c.l.b16 %v672
    %v886 = vunpack.c.l.b16 %v673
    %v887 = vunpack.c.l.b16 %v674
    %v888 = vunpack.c.l.b16 %v675
    %v889 = vunpack.c.l.b16 %v676
    %v890 = vunpack.c.l.b16 %v677
    %v891 = vunpack.c.l.b16 %v678
    %v892 = vunpack.c.l.b16 %v679
    %v893 = vunpack.c.l.b16 %v680
    %v894 = vunpack.c.l.b16 %v681
    %v895 = vunpack.c.l.b16 %v682
    %v896 = vunpack.c.l.b16 %v683
    %v897 = vunpack.c.l.b16 %v684
    %v898 = vunpack.c.l.b16 %v685
    %v899 = vunpack.c.l.b16 %v686
    %v900 = vunpack.c.l.b16 %v687
    %v901 = vunpack.c.l.b16 %v688
    %v902 = vunpack.c.l.b16 %v689
    %v903 = vunpack.c.l.b16 %v690
    %v904 = vunpack.c.l.b16 %v691
    %v905 = vunpack.c.l.b16 %v692
    %v906 = vunpack.c.l.b16 %v693
    %v907 = vunpack.c.l.b16 %v694
    %v908 = vunpack.c.l.b16 %v695
    %v909 = vunpack.c.l.b16 %v696
    %v910 = vunpack.c.l.b16 %v697
    %v911 = vunpack.c.l.b16 %v698
    %v912 = vunpack.c.l.b16 %v699
    %v913 = vunpack.c.l.b16 %v700
    %v914 = vunpack.c.l.b16 %v701
    %v915 = vunpack.c.l.b16 %v702
    %v916 = vunpack.c.l.b16 %v703
    %v917 = vunpack.c.l.b16 %v704
    %v918 = vunpack.c.l.b16 %v705
    %v919 = vunpack.c.l.b16 %v706
    %v920 = vunpack.c.l.b16 %v707
    %v921 = vunpack.c.l.b16 %v708
    %v922 = vunpack.c.l.b16 %v709
    %v923 = vunpack.c.l.b16 %v710
    %v924 = vunpack.c.l.b16 %v711
    %v925 = vunpack.c.l.b16 %v712
    %v926 = vunpack.c.l.b16 %v713
    %v927 = vunpack.c.l.b16 %v714
    %v928 = vunpack.c.l.b16 %v715
    %v929 = vunpack.c.l.b16 %v716
    %v930 = vunpack.c.l.b16 %v717
    %v931 = vunpack.c.l.b16 %v718
    %v932 = vunpack.c.l.b16 %v719
    %v933 = vunpack.c.l.b16 %v720
    %v934 = vunpack.c.l.b16 %v721
    %v935 = vunpack.c.l.b16 %v722
    %v936 = vunpack.c.l.b16 %v723
    %v937 = vunpack.c.l.b16 %v724
    %v938 = vunpack.c.l.b16 %v725
    %v939 = vunpack.c.l.b16 %v726
    %v940 = vunpack.c.l.b16 %v727
    %v941 = vunpack.c.l.b16 %v728
    %v942 = vunpack.c.l.b16 %v729
    %v943 = vunpack.c.l.b16 %v730
    %v944 = vunpack.c.l.b16 %v731
    %v945 = vunpack.c.l.b16 %v732
    %v946 = vunpack.c.l.b16 %v733
    %v947 = vunpack.c.l.b16 %v734
    %v948 = vunpack.c.l.b16 %v735
    %v949 = vunpack.c.l.b16 %v736
    %v950 = vunpack.c.l.b16 %v737
    %v951 = vunpack.c.l.b16 %v738
    %v952 = vunpack.c.l.b16 %v739
    %v953 = vunpack.c.l.b16 %v740
    %v954 = vunpack.c.l.b16 %v741
    %v955 = vunpack.c.l.b16 %v742
    %v956 = vunpack.c.l.b16 %v743
    %v957 = vunpack.c.l.b16 %v744
    %v958 = vunpack.c.l.b16 %v745
    %v959 = vpack.c.b16 %v864, %v863
    %v960 = vpack.c.b16 %v866, %v865
    %v961 = vpack.c.b16 %v868, %v867
    %v962 = vpack.c.b16 %v870, %v869
    %v963 = vpack.c.b16 %v872, %v871
    %v964 = vpack.c.b16 %v874, %v873
    %v965 = vpack.c.b16 %v876, %v875
    %v966 = vpack.c.b16 %v878, %v877
    %v967 = vpack.c.b16 %v880, %v879
    %v968 = vpack.c.b16 %v882, %v881
    %v969 = vpack.c.b16 %v884, %v883
    %v970 = vpack.c.b16 %v886, %v885
    %v971 = vpack.c.b16 %v888, %v887
    %v972 = vpack.c.b16 %v890, %v889
    %v973 = vpack.c.b16 %v892, %v891
    %v974 = vpack.c.b16 %v894, %v893
    %v975 = vpack.c.b16 %v896, %v895
    %v976 = vpack.c.b16 %v898, %v897
    %v977 = vpack.c.b16 %v900, %v899
    %v978 = vpack.c.b16 %v902, %v901
    %v979 = vpack.c.b16 %v904, %v903
    %v980 = vpack.c.b16 %v906, %v905
    %v981 = vpack.c.b16 %v908, %v907
    %v982 = vpack.c.b16 %v910, %v909
    %v983 = vpack.c.b16 %v912, %v911
    %v984 = vpack.c.b16 %v914, %v913
    %v985 = vpack.c.b16 %v916, %v915
    %v986 = vpack.c.b16 %v918, %v917
    %v987 = vpack.c.b16 %v920, %v919
    %v988 = vpack.c.b16 %v922, %v921
    %v989 = vpack.c.b16 %v924, %v923
    %v990 = vpack.c.b16 %v926, %v925
    %v991 = vpack.c.b16 %v928, %v927
    %v992 = vpack.c.b16 %v930, %v929
    %v993 = vpack.c.b16 %v932, %v931
    %v994 = vpack.c.b16 %v934, %v933
    %v995 = vpack.c.b16 %v936, %v935
    %v996 = vpack.c.b16 %v938, %v937
    %v997 = vpack.c.b16 %v940, %v939
    %v998 = vpack.c.b16 %v942, %v941
    %v999 = vpack.c.b16 %v944, %v943
    %v1000 = vpack.c.b16 %v946, %v945
    %v1001 = vpack.c.b16 %v948, %v947
    %v1002 = vpack.c.b16 %v950, %v949
    %v1003 = vpack.c.b16 %v952, %v951
    %v1004 = vpack.c.b16 %v954, %v953
    %v1005 = vpack.c.b16 %v956, %v955
    %v1006 = vpack.c.b16 %v958, %v957
    %1055 = vmatprep.subr.bf16.mxu0 0
    %1056 = vmatpush1.bf16.msra.mxu0 %v966
    %1057 = vmatprep.subr.bf16.mxu0 0
    %1058 = vmatpush1.bf16.msra.mxu0 %v965
    %1059 = vmatprep.subr.bf16.mxu0 0
    %1060 = vmatpush1.bf16.msra.mxu0 %v964
    %1061 = vmatprep.subr.bf16.mxu0 0
    %1062 = vmatpush1.bf16.msra.mxu0 %v963
    %1063 = vmatprep.subr.bf16.mxu0 0
    %1064 = vmatpush1.bf16.msra.mxu0 %v962
    %1065 = vmatprep.subr.bf16.mxu0 0
    %1066 = vmatpush1.bf16.msra.mxu0 %v961
    %1067 = vmatprep.subr.bf16.mxu0 0
    %1068 = vmatpush1.bf16.msra.mxu0 %v960
    %1069 = vmatprep.subr.bf16.mxu0 0
    %1070 = vmatpush1.bf16.msra.mxu0 %v959
    %1071 = vmatprep.subr.bf16.mxu0 0
    %1072 = vmatpush2.bf16.msra.mxu0 %v974
    %1073 = vmatprep.subr.bf16.mxu0 0
    %1074 = vmatpush2.bf16.msra.mxu0 %v973
    %1075 = vmatprep.subr.bf16.mxu0 0
    %1076 = vmatpush2.bf16.msra.mxu0 %v972
    %1077 = vmatprep.subr.bf16.mxu0 0
    %1078 = vmatpush2.bf16.msra.mxu0 %v971
    %1079 = vmatprep.subr.bf16.mxu0 0
    %1080 = vmatpush2.bf16.msra.mxu0 %v970
    %1081 = vmatprep.subr.bf16.mxu0 0
    %1082 = vmatpush2.bf16.msra.mxu0 %v969
    %1083 = vmatprep.subr.bf16.mxu0 0
    %1084 = vmatpush2.bf16.msra.mxu0 %v968
    %1085 = vmatprep.subr.bf16.mxu0 0
    %1086 = vmatpush2.bf16.msra.mxu0 %v967
    %1087 = vmatprep.mubr.bf16.mxu0 %v756
    %1088 = vmatmul.mubr.bf16.gmra.mxu0 %v755
    %v1089 = vpop.f32.mrf.mxu0
    %v1090 = vadd.f32 0.0, %v1089
    %v1091 = vpop.f32.mrf.mxu0
    %v1092 = vpop.f32.mrf.mxu0
    %v1093 = vpop.f32.mrf.mxu0
    %1094 = vdwg.mxu0
    %1095 = vmatprep.subr.bf16.mxu0 0
    %1096 = vmatpush1.bf16.msra.mxu0 %v982
    %1097 = vmatprep.subr.bf16.mxu0 0
    %1098 = vmatpush1.bf16.msra.mxu0 %v981
    %1099 = vmatprep.subr.bf16.mxu0 0
    %1100 = vmatpush1.bf16.msra.mxu0 %v980
    %1101 = vmatprep.subr.bf16.mxu0 0
    %1102 = vmatpush1.bf16.msra.mxu0 %v979
    %1103 = vmatprep.subr.bf16.mxu0 0
    %1104 = vmatpush1.bf16.msra.mxu0 %v978
    %1105 = vmatprep.subr.bf16.mxu0 0
    %1106 = vmatpush1.bf16.msra.mxu0 %v977
    %1107 = vmatprep.subr.bf16.mxu0 0
    %1108 = vmatpush1.bf16.msra.mxu0 %v976
    %1109 = vmatprep.subr.bf16.mxu0 0
    %1110 = vmatpush1.bf16.msra.mxu0 %v975
    %1111 = vmatprep.subr.bf16.mxu0 0
    %1112 = vmatpush2.bf16.msra.mxu0 %v990
    %1113 = vmatprep.subr.bf16.mxu0 0
    %1114 = vmatpush2.bf16.msra.mxu0 %v989
    %1115 = vmatprep.subr.bf16.mxu0 0
    %1116 = vmatpush2.bf16.msra.mxu0 %v988
    %1117 = vmatprep.subr.bf16.mxu0 0
    %1118 = vmatpush2.bf16.msra.mxu0 %v987
    %1119 = vmatprep.subr.bf16.mxu0 0
    %1120 = vmatpush2.bf16.msra.mxu0 %v986
    %1121 = vmatprep.subr.bf16.mxu0 0
    %1122 = vmatpush2.bf16.msra.mxu0 %v985
    %1123 = vmatprep.subr.bf16.mxu0 0
    %1124 = vmatpush2.bf16.msra.mxu0 %v984
    %1125 = vmatprep.subr.bf16.mxu0 0
    %1126 = vmatpush2.bf16.msra.mxu0 %v983
    %1127 = vmatprep.mubr.bf16.mxu0 %v758
    %1128 = vmatmul.mubr.bf16.gmra.mxu0 %v757
    %v1129 = vpop.f32.mrf.mxu0
    %v1130 = vadd.f32 %v1090, %v1129
    %v1131 = vpop.f32.mrf.mxu0
    %v1132 = vpop.f32.mrf.mxu0
    %v1133 = vpop.f32.mrf.mxu0
    %1134 = vdwg.mxu0
    %1135 = vmatprep.subr.bf16.mxu0 0
    %1136 = vmatpush1.bf16.msra.mxu0 %v998
    %1137 = vmatprep.subr.bf16.mxu0 0
    %1138 = vmatpush1.bf16.msra.mxu0 %v997
    %1139 = vmatprep.subr.bf16.mxu0 0
    %1140 = vmatpush1.bf16.msra.mxu0 %v996
    %1141 = vmatprep.subr.bf16.mxu0 0
    %1142 = vmatpush1.bf16.msra.mxu0 %v995
    %1143 = vmatprep.subr.bf16.mxu0 0
    %1144 = vmatpush1.bf16.msra.mxu0 %v994
    %1145 = vmatprep.subr.bf16.mxu0 0
    %1146 = vmatpush1.bf16.msra.mxu0 %v993
    %1147 = vmatprep.subr.bf16.mxu0 0
    %1148 = vmatpush1.bf16.msra.mxu0 %v992
    %1149 = vmatprep.subr.bf16.mxu0 0
    %1150 = vmatpush1.bf16.msra.mxu0 %v991
    %1151 = vmatprep.subr.bf16.mxu0 0
    %1152 = vmatpush2.bf16.msra.mxu0 %v1006
    %1153 = vmatprep.subr.bf16.mxu0 0
    %1154 = vmatpush2.bf16.msra.mxu0 %v1005
    %1155 = vmatprep.subr.bf16.mxu0 0
    %1156 = vmatpush2.bf16.msra.mxu0 %v1004
    %1157 = vmatprep.subr.bf16.mxu0 0
    %1158 = vmatpush2.bf16.msra.mxu0 %v1003
    %1159 = vmatprep.subr.bf16.mxu0 0
    %1160 = vmatpush2.bf16.msra.mxu0 %v1002
    %1161 = vmatprep.subr.bf16.mxu0 0
    %1162 = vmatpush2.bf16.msra.mxu0 %v1001
    %1163 = vmatprep.subr.bf16.mxu0 0
    %1164 = vmatpush2.bf16.msra.mxu0 %v1000
    %1165 = vmatprep.subr.bf16.mxu0 0
    %1166 = vmatpush2.bf16.msra.mxu0 %v999
    %1167 = vmatprep.mubr.bf16.mxu0 %v760
    %1168 = vmatmul.mubr.bf16.gmra.mxu0 %v759
    %v1169 = vpop.f32.mrf.mxu0
    %v1170 = vadd.f32 %v1130, %v1169
    %v1171 = vpop.f32.mrf.mxu0
    %v1172 = vpop.f32.mrf.mxu0
    %v1173 = vpop.f32.mrf.mxu0
    %1174 = vdwg.mxu0
    %v1179 = vunpack.c.l.b16 %v643
    %v1180 = vunpack.c.l.b16 %v644
    %v1181 = vunpack.c.l.b16 %v645
    %v1182 = vunpack.c.l.b16 %v646
    %v1183 = vpack.c.b16 %v1180, %v1179
    %v1184 = vpack.c.b16 %v1182, %v1181
    %v1188 = vsel %vm155, %v642, 0
    %1190 = vmatprep.subr.bf16.mxu0 0
    %1191 = vmatpush1.bf16.msra.mxu0 0
    %1192 = vmatprep.subr.bf16.mxu0 0
    %1193 = vmatpush1.bf16.msra.mxu0 0
    %1194 = vmatprep.subr.bf16.mxu0 0
    %1195 = vmatpush1.bf16.msra.mxu0 0
    %1196 = vmatprep.subr.bf16.mxu0 0
    %1197 = vmatpush1.bf16.msra.mxu0 0
    %1198 = vmatprep.subr.bf16.mxu0 0
    %1199 = vmatpush1.bf16.msra.mxu0 0
    %1200 = vmatprep.subr.bf16.mxu0 0
    %1201 = vmatpush1.bf16.msra.mxu0 0
    %1202 = vmatprep.subr.bf16.mxu0 0
    %1203 = vmatpush1.bf16.msra.mxu0 %v1184
    %1204 = vmatprep.subr.bf16.mxu0 0
    %1205 = vmatpush1.bf16.msra.mxu0 %v1183
    %1206 = vmatprep.subr.bf16.mxu0 0
    %1207 = vmatpush2.bf16.msra.mxu0 0
    %1208 = vmatprep.subr.bf16.mxu0 0
    %1209 = vmatpush2.bf16.msra.mxu0 0
    %1210 = vmatprep.subr.bf16.mxu0 0
    %1211 = vmatpush2.bf16.msra.mxu0 0
    %1212 = vmatprep.subr.bf16.mxu0 0
    %1213 = vmatpush2.bf16.msra.mxu0 0
    %1214 = vmatprep.subr.bf16.mxu0 0
    %1215 = vmatpush2.bf16.msra.mxu0 0
    %1216 = vmatprep.subr.bf16.mxu0 0
    %1217 = vmatpush2.bf16.msra.mxu0 0
    %1218 = vmatprep.subr.bf16.mxu0 0
    %1219 = vmatpush2.bf16.msra.mxu0 0
    %1220 = vmatprep.subr.bf16.mxu0 0
    %1221 = vmatpush2.bf16.msra.mxu0 0
    %1222 = vmatprep.mubr.bf16.mxu0 0
    %1223 = vmatmul.mubr.bf16.gmra.mxu0 %v1188
    %v1224 = vpop.f32.mrf.mxu0
    %v1225 = vadd.f32 %v1170, %v1224
    %v1226 = vpop.f32.mrf.mxu0
    %v1227 = vpop.f32.mrf.mxu0
    %v1228 = vpop.f32.mrf.mxu0
    %1229 = vdwg.mxu0
    %v1230 = vld [vmem:[%s13] sm:$0x1]
    %v1232 = vlaneseq
    %v1233 = vshrl.u32 %v1232, 7
    %v1234 = vsub.s32 0, %v1233
    %v1235 = vrot.slane %v1230, %v1234
    %v1237 = vadd.f32 %v1225, %v1235
    %v1238 = vmax.f32 %v1237, 0.0
    %v1239 = vld [vmem:[%s15] sm:$0x1]
    %v1240 = vld [vmem:[#allocation2] sm:$0x1]
    %1242 = vset.pattern.permute.xlu0 0
    %1243 = vperm.xlu0 %1242, %v1240
    %v1244 = vpop.permute.xlu0 %1243
    %v1246 = vlaneseq
    %v1247 = vshrl.u32 %v1246, 7
    %v1248 = vsub.s32 0, %v1247
    %v1249 = vrot.slane %v1244, %v1248
    %v1251 = vsel %vm155, %v1239, 0
    %v1254 = vsel %vm155, %v1238, 0
    %1256 = vmatprep.subr.mxu0 0.0
    %1257 = vmatpush1.xpose.msra.mxu0 0.0
    %1258 = vmatprep.subr.mxu0 0.0
    %1259 = vmatpush1.xpose.msra.mxu0 0.0
    %1260 = vmatprep.subr.mxu0 0.0
    %1261 = vmatpush1.xpose.msra.mxu0 0.0
    %1262 = vmatprep.subr.mxu0 0.0
    %1263 = vmatpush1.xpose.msra.mxu0 0.0
    %1264 = vmatprep.subr.mxu0 0.0
    %1265 = vmatpush1.xpose.msra.mxu0 0.0
    %1266 = vmatprep.subr.mxu0 0.0
    %1267 = vmatpush1.xpose.msra.mxu0 0.0
    %1268 = vmatprep.subr.mxu0 0.0
    %1269 = vmatpush1.xpose.msra.mxu0 0.0
    %1270 = vmatprep.subr.mxu0 0.0
    %1271 = vmatpush1.xpose.msra.mxu0 0.0
    %1272 = vmatprep.subr.mxu0 0.0
    %1273 = vmatpush1.xpose.msra.mxu0 0.0
    %1274 = vmatprep.subr.mxu0 0.0
    %1275 = vmatpush1.xpose.msra.mxu0 0.0
    %1276 = vmatprep.subr.mxu0 0.0
    %1277 = vmatpush1.xpose.msra.mxu0 0.0
    %1278 = vmatprep.subr.mxu0 0.0
    %1279 = vmatpush1.xpose.msra.mxu0 0.0
    %1280 = vmatprep.subr.mxu0 0.0
    %1281 = vmatpush1.xpose.msra.mxu0 0.0
    %1282 = vmatprep.subr.mxu0 0.0
    %1283 = vmatpush1.xpose.msra.mxu0 0.0
    %1284 = vmatprep.subr.mxu0 0.0
    %1285 = vmatpush1.xpose.msra.mxu0 0.0
    %1286 = vmatprep.subr.mxu0 0.0
    %1287 = vmatpush1.xpose.msra.mxu0 %v1254
    %1288 = vmatprep.subr.mxu0 0.0
    %1289 = vmatpush2.xpose.msra.mxu0 0.0
    %1290 = vmatprep.subr.mxu0 0.0
    %1291 = vmatpush2.xpose.msra.mxu0 0.0
    %1292 = vmatprep.subr.mxu0 0.0
    %1293 = vmatpush2.xpose.msra.mxu0 0.0
    %1294 = vmatprep.subr.mxu0 0.0
    %1295 = vmatpush2.xpose.msra.mxu0 0.0
    %1296 = vmatprep.subr.mxu0 0.0
    %1297 = vmatpush2.xpose.msra.mxu0 0.0
    %1298 = vmatprep.subr.mxu0 0.0
    %1299 = vmatpush2.xpose.msra.mxu0 0.0
    %1300 = vmatprep.subr.mxu0 0.0
    %1301 = vmatpush2.xpose.msra.mxu0 0.0
    %1302 = vmatprep.subr.mxu0 0.0
    %1303 = vmatpush2.xpose.msra.mxu0 0.0
    %1304 = vmatprep.subr.mxu0 0.0
    %1305 = vmatpush2.xpose.msra.mxu0 0.0
    %1306 = vmatprep.subr.mxu0 0.0
    %1307 = vmatpush2.xpose.msra.mxu0 0.0
    %1308 = vmatprep.subr.mxu0 0.0
    %1309 = vmatpush2.xpose.msra.mxu0 0.0
    %1310 = vmatprep.subr.mxu0 0.0
    %1311 = vmatpush2.xpose.msra.mxu0 0.0
    %1312 = vmatprep.subr.mxu0 0.0
    %1313 = vmatpush2.xpose.msra.mxu0 0.0
    %1314 = vmatprep.subr.mxu0 0.0
    %1315 = vmatpush2.xpose.msra.mxu0 0.0
    %1316 = vmatprep.subr.mxu0 0.0
    %1317 = vmatpush2.xpose.msra.mxu0 0.0
    %1318 = vmatprep.subr.mxu0 0.0
    %1319 = vmatpush2.xpose.msra.mxu0 0.0
    %1320 = vmatprep.mubr.f32.mxu0 0.0
    %1321 = vmatmul.mubr.f32.gmra.mxu0 %v1251
    %v1322 = vpop.f32.mrf.mxu0
    %v1323 = vadd.f32 %v1249, %v1322
    %v1324 = vpop.f32.mrf.mxu0
    %1325 = vdwg.mxu0
    %vm1326 = vcmask 57344
    %1327 = vst.msk [vmem:[#allocation3] sm:$0x1] %vm1326, %v1323
    // Predicated region
    $region70: #{tpu_custom_call.1} parent=1 // pred_check
      _
    $region71: #{tpu_custom_call.1} parent=1 // pred_check_branch
      %1329 = sbr.rel (0) target = $region73
    $region72: #{tpu_custom_call.1} parent=1 // pred_region
      %s1331 = ssub.s32 16, 16
      %1332 = vsyncadd [#allocation4], %s1331
      %s1334 = sshll.u32 [#allocation3], 4
      %s1335 = int_to_ptr.vmem [resolvable:$true] %s1334
      %1337 = dma.vmem_to_hbm [thread:$0]  %s1335, 16, %s17, [#allocation4]
    $region73: #{tpu_custom_call.1} parent=1 // pred_fallthru
      _
    // Predicated region
    $region74: #{tpu_custom_call.1} parent=1 // pred_check
      _
    $region75: #{tpu_custom_call.1} parent=1 // pred_check_branch
      %1339 = sbr.rel (0) target = $region77
    $region76: #{tpu_custom_call.1} parent=1 // pred_region
      %1340 = dma.done [#allocation4], 16
    $region77: #{tpu_custom_call.1} parent=1 // pred_fallthru
      _
    %1341 = vsyncpa [#allocation4], 1

</llo_original>
